<compile_context>
chip_gen: v5e
topology: v5e:2x2
jax: 0.10.0
libtpu: 0.0.40
codegen_flags: <defaults>
</compile_context>

<pallas_src>
import jax
import jax.numpy as jnp
from jax import lax
from jax.experimental import pallas as pl
from jax.experimental.pallas import tpu as pltpu


# ----------------------------------------------------------------------------
# Fused kernel factory
# ----------------------------------------------------------------------------
def _make_fused_lstm_kernel(num_layers, B, Tc, H):
    """Kernel over grid=(S//Tc,). Ref order:
       inputs : x_chunk, h0, c0, [wihT_l, whhT_l, bias_l]*L, fcwT, fcb
       outputs: fc_out, h_n, c_n
       scratch: h_state(L,B,H), c_state(L,B,H), gx(Tc*B,4H), seq(Tc*B,H)
    """
    G = 4 * H

    def kernel(*refs):
        x_ref, h0_ref, c0_ref = refs[0], refs[1], refs[2]
        idx = 3
        wihT, whhT, bias = [], [], []
        for _ in range(num_layers):
            wihT.append(refs[idx]); whhT.append(refs[idx + 1]); bias.append(refs[idx + 2])
            idx += 3
        fcwT_ref, fcb_ref = refs[idx], refs[idx + 1]
        fc_ref, hN_ref, cN_ref = refs[idx + 2], refs[idx + 3], refs[idx + 4]
        h_sc, c_sc, gx_sc, seq_sc = (refs[idx + 5], refs[idx + 6],
                                     refs[idx + 7], refs[idx + 8])

        c_idx = pl.program_id(0)
        last = pl.num_programs(0) - 1

        # Load initial state once (persists across grid steps in VMEM scratch).
        @pl.when(c_idx == 0)
        def _():
            h_sc[...] = h0_ref[...].astype(jnp.float32)
            c_sc[...] = c0_ref[...].astype(jnp.float32)

        h_finals, c_finals = [], []
        for l in range(num_layers):
            mm_dtype = whhT[l].dtype

            # Hoisted per-chunk input projection: one MXU matmul over Tc*B rows
            # (instead of Tc tiny B-row matmuls inside the serial loop).
            x_chunk = x_ref[...] if l == 0 else seq_sc[...]
            gx_sc[...] = (jnp.dot(x_chunk.astype(mm_dtype), wihT[l][...],
                                  preferred_element_type=jnp.float32)
                          + bias[l][...])

            h_init = h_sc[l]
            c_init = c_sc[l]
            write_seq = (l < num_layers - 1)

            def step(tt, carry, _l=l, _write_seq=write_seq, _mm=mm_dtype):
                h, c = carry                                   # register carry
                gates = (gx_sc[pl.ds(tt * B, B), :]
                         + jnp.dot(h.astype(_mm), whhT[_l][...],
                                   preferred_element_type=jnp.float32))
                # PyTorch gate order: i, f, g, o
                i = jax.nn.sigmoid(gates[:, 0 * H:1 * H])
                f = jax.nn.sigmoid(gates[:, 1 * H:2 * H])
                g = jnp.tanh(gates[:, 2 * H:3 * H])
                o = jax.nn.sigmoid(gates[:, 3 * H:4 * H])
                c_new = f * c + i * g
                h_new = o * jnp.tanh(c_new)
                if _write_seq:
                    # Next layer's input chunk — stays in VMEM, never hits HBM.
                    seq_sc[pl.ds(tt * B, B), :] = h_new
                return (h_new, c_new)

            h_f, c_f = lax.fori_loop(0, Tc, step, (h_init, c_init), unroll=True)

            # Persist per-layer state across time-chunks (once per chunk).
            h_sc[l] = h_f
            c_sc[l] = c_f
            h_finals.append(h_f)
            c_finals.append(c_f)

        # Write outputs only on the final chunk (resident output blocks).
        @pl.when(c_idx == last)
        def _():
            for l in range(num_layers):
                hN_ref[l] = h_finals[l].astype(hN_ref.dtype)
                cN_ref[l] = c_finals[l].astype(cN_ref.dtype)
            fc_ref[...] = (jnp.dot(h_finals[num_layers - 1].astype(fcwT_ref.dtype),
                                   fcwT_ref[...],
                                   preferred_element_type=jnp.float32)
                           + fcb_ref[...]).astype(fc_ref.dtype)

    return kernel


# ----------------------------------------------------------------------------
# Wrapper
# ----------------------------------------------------------------------------
def _pick_time_chunk(S, B):
    """Largest Tc <= 256 dividing S with Tc*B a multiple of 8; else whole seq."""
    for tc in range(min(S, 256), 0, -1):
        if S % tc == 0 and (tc * B) % 8 == 0:
            return tc
    return S  # Tc == S: block equals full extent, always valid.


def lstm_network_forward(params, x, h0, c0, *, matmul_dtype=jnp.float32):
    """Mirrors LSTMNetwork.forward.

    x : (batch, seq, input_size)  [batch_first, like PyTorch]
    h0, c0 : (num_layers, batch, hidden)
    matmul_dtype: set to jnp.bfloat16 on v6e/v7x for ~2x MXU throughput
                  (breaks bit-exactness vs the f32 reference).
    Returns (out: (batch, output_size), (h_n, c_n)).
    """
    B, S, F = x.shape
    L = len(params["lstm"])
    H = params["lstm"][0][1].shape[1]               # w_hh: (4H, H)
    G = 4 * H
    O = params["fc_w"].shape[0]
    Tc = _pick_time_chunk(S, B)

    # Time-major flatten (single tiny XLA transpose); row t*B+b = (t, b).
    x_tm = jnp.transpose(x, (1, 0, 2)).reshape(S * B, F).astype(matmul_dtype)

    operands = [x_tm, h0, c0]
    in_specs = [
        pl.BlockSpec((Tc * B, F), lambda c: (c, 0)),          # input chunk
        pl.BlockSpec((L, B, H), lambda c: (0, 0, 0)),         # h0 (resident)
        pl.BlockSpec((L, B, H), lambda c: (0, 0, 0)),         # c0 (resident)
    ]
    for l in range(L):
        w_ih, w_hh, b_ih, b_hh = params["lstm"][l]
        F_l = w_ih.shape[1]
        operands += [
            jnp.transpose(w_ih).astype(matmul_dtype),         # (F_l, 4H)
            jnp.transpose(w_hh).astype(matmul_dtype),         # (H, 4H)
            (b_ih + b_hh).reshape(1, G).astype(jnp.float32),  # combined bias
        ]
        in_specs += [
            pl.BlockSpec((F_l, G), lambda c: (0, 0)),
            pl.BlockSpec((H, G), lambda c: (0, 0)),
            pl.BlockSpec((1, G), lambda c: (0, 0)),
        ]
    operands += [jnp.transpose(params["fc_w"]).astype(matmul_dtype),   # (H, O)
                 params["fc_b"].reshape(1, O).astype(jnp.float32)]
    in_specs += [pl.BlockSpec((H, O), lambda c: (0, 0)),
                 pl.BlockSpec((1, O), lambda c: (0, 0))]

    out_shapes = (
        jax.ShapeDtypeStruct((B, O), jnp.float32),            # fc output
        jax.ShapeDtypeStruct((L, B, H), jnp.float32),         # h_n
        jax.ShapeDtypeStruct((L, B, H), jnp.float32),         # c_n
    )
    out_specs = [
        pl.BlockSpec((B, O), lambda c: (0, 0)),
        pl.BlockSpec((L, B, H), lambda c: (0, 0, 0)),
        pl.BlockSpec((L, B, H), lambda c: (0, 0, 0)),
    ]
    scratch_shapes = [
        pltpu.VMEM((L, B, H), jnp.float32),                   # h state per layer
        pltpu.VMEM((L, B, H), jnp.float32),                   # c state per layer
        pltpu.VMEM((Tc * B, G), jnp.float32),                 # gate_x chunk
        pltpu.VMEM((Tc * B, H), jnp.float32),                 # inter-layer chunk
    ]

    grid_spec = pltpu.PrefetchScalarGridSpec(
        num_scalar_prefetch=0,
        grid=(S // Tc,),
        in_specs=in_specs,
        out_specs=out_specs,
        scratch_shapes=scratch_shapes,
    )

    fc_out, h_n, c_n = pl.pallas_call(
        _make_fused_lstm_kernel(L, B, Tc, H),
        out_shape=out_shapes,
        grid_spec=grid_spec,
        compiler_params=pltpu.CompilerParams(
            dimension_semantics=("arbitrary",)),              # recurrent in time
    )(*operands)

    return fc_out, (h_n, c_n)


# ----------------------------------------------------------------------------
# Pure-JAX reference (for correctness check)
# ----------------------------------------------------------------------------
def lstm_network_ref(params, x, h0, c0):
    num_layers = len(params["lstm"])
    B, S, _ = x.shape
    layer_in = x
    h_finals, c_finals = [], []
    for l in range(num_layers):
        w_ih, w_hh, b_ih, b_hh = params["lstm"][l]
        H = w_hh.shape[1]
        h = h0[l]
        c = c0[l]
        outs = []
        for t in range(S):
            gates = layer_in[:, t, :] @ w_ih.T + b_ih + h @ w_hh.T + b_hh
            i = jax.nn.sigmoid(gates[:, 0 * H:1 * H])
            f = jax.nn.sigmoid(gates[:, 1 * H:2 * H])
            g = jnp.tanh(gates[:, 2 * H:3 * H])
            o = jax.nn.sigmoid(gates[:, 3 * H:4 * H])
            c = f * c + i * g
            h = o * jnp.tanh(c)
            outs.append(h)
        layer_in = jnp.stack(outs, axis=1)
        h_finals.append(h)
        c_finals.append(c)
    out = layer_in[:, -1, :] @ params["fc_w"].T + params["fc_b"]
    return out, (jnp.stack(h_finals), jnp.stack(c_finals))


# ----------------------------------------------------------------------------
# Deterministic parameter init (PyTorch-style uniform(-1/sqrt(H), 1/sqrt(H)))
# ----------------------------------------------------------------------------
def init_params(key, input_size, hidden_size, num_layers, output_size):
    bound = 1.0 / jnp.sqrt(hidden_size)
    lstm_params = []
    for l in range(num_layers):
        in_sz = input_size if l == 0 else hidden_size
        key, k1, k2, k3, k4 = jax.random.split(key, 5)
        w_ih = jax.random.uniform(k1, (4 * hidden_size, in_sz),
                                  jnp.float32, -bound, bound)
        w_hh = jax.random.uniform(k2, (4 * hidden_size, hidden_size),
                                  jnp.float32, -bound, bound)
        b_ih = jax.random.uniform(k3, (4 * hidden_size,),
                                  jnp.float32, -bound, bound)
        b_hh = jax.random.uniform(k4, (4 * hidden_size,),
                                  jnp.float32, -bound, bound)
        lstm_params.append((w_ih, w_hh, b_ih, b_hh))
    key, k1, k2 = jax.random.split(key, 3)
    fc_w = jax.random.uniform(k1, (output_size, hidden_size),
                              jnp.float32, -bound, bound)
    fc_b = jax.random.uniform(k2, (output_size,), jnp.float32, -bound, bound)
    return {"lstm": lstm_params, "fc_w": fc_w, "fc_b": fc_b}


# ----------------------------------------------------------------------------
# Main
# ----------------------------------------------------------------------------
if __name__ == "__main__":
    input_size = 16
    hidden_size = 32
    num_layers = 2
    output_size = 4
    batch = 2
    seq = 8

    key = jax.random.PRNGKey(0)
    key, kx, kh, kc = jax.random.split(key, 4)
    params = init_params(key, input_size, hidden_size, num_layers, output_size)

    x = jax.random.normal(kx, (batch, seq, input_size), jnp.float32)
    h0 = jax.random.normal(kh, (num_layers, batch, hidden_size), jnp.float32)
    c0 = jax.random.normal(kc, (num_layers, batch, hidden_size), jnp.float32)

    out, (h_n, c_n) = lstm_network_forward(params, x, h0, c0)
    jax.block_until_ready((out, h_n, c_n))

    # Correctness check against pure-JAX reference (f32 path, bit-comparable)
    out_r, (h_r, c_r) = lstm_network_ref(params, x, h0, c0)
    assert out.shape == (batch, output_size)
    assert h_n.shape == (num_layers, batch, hidden_size)
    assert c_n.shape == (num_layers, batch, hidden_size)
    assert jnp.allclose(out, out_r, atol=1e-5, rtol=1e-5)
    assert jnp.allclose(h_n, h_r, atol=1e-5, rtol=1e-5)
    assert jnp.allclose(c_n, c_r, atol=1e-5, rtol=1e-5)

    print("KERNEL_OK")
</pallas_src>

<mosaic_0001>
module attributes {stable_mosaic.version = 11 : i64} {
  func.func @kernel(%arg0: i32, %arg1: memref<16x16xf32, #tpu.memory_space<vmem>>, %arg2: memref<2x2x32xf32, #tpu.memory_space<vmem>>, %arg3: memref<2x2x32xf32, #tpu.memory_space<vmem>>, %arg4: memref<16x128xf32, #tpu.memory_space<vmem>>, %arg5: memref<32x128xf32, #tpu.memory_space<vmem>>, %arg6: memref<1x128xf32, #tpu.memory_space<vmem>>, %arg7: memref<32x128xf32, #tpu.memory_space<vmem>>, %arg8: memref<32x128xf32, #tpu.memory_space<vmem>>, %arg9: memref<1x128xf32, #tpu.memory_space<vmem>>, %arg10: memref<32x4xf32, #tpu.memory_space<vmem>>, %arg11: memref<1x4xf32, #tpu.memory_space<vmem>>, %arg12: memref<2x4xf32, #tpu.memory_space<vmem>>, %arg13: memref<2x2x32xf32, #tpu.memory_space<vmem>>, %arg14: memref<2x2x32xf32, #tpu.memory_space<vmem>>, %arg15: memref<2x2x32xf32, #tpu.memory_space<vmem>>, %arg16: memref<2x2x32xf32, #tpu.memory_space<vmem>>, %arg17: memref<16x128xf32, #tpu.memory_space<vmem>>, %arg18: memref<16x32xf32, #tpu.memory_space<vmem>>) attributes {dimension_semantics = [#tpu.dimension_semantics<arbitrary>], iteration_bounds = array<i64: 1>, scalar_prefetch = 0 : i64, scratch_operands = 4 : i64, tpu.core_type = #tpu.core_type<tc>, window_params = [{transform_indices = @transform_0, window_bounds = array<i64: 16, 16>}, {pipeline_mode = #tpu.pipeline_mode<synchronous>, transform_indices = @transform_1, window_bounds = array<i64: 2, 2, 32>}, {pipeline_mode = #tpu.pipeline_mode<synchronous>, transform_indices = @transform_2, window_bounds = array<i64: 2, 2, 32>}, {pipeline_mode = #tpu.pipeline_mode<synchronous>, transform_indices = @transform_3, window_bounds = array<i64: 16, 128>}, {pipeline_mode = #tpu.pipeline_mode<synchronous>, transform_indices = @transform_4, window_bounds = array<i64: 32, 128>}, {pipeline_mode = #tpu.pipeline_mode<synchronous>, transform_indices = @transform_5, window_bounds = array<i64: 1, 128>}, {pipeline_mode = #tpu.pipeline_mode<synchronous>, transform_indices = @transform_6, window_bounds = array<i64: 32, 128>}, {pipeline_mode = #tpu.pipeline_mode<synchronous>, transform_indices = @transform_7, window_bounds = array<i64: 32, 128>}, {pipeline_mode = #tpu.pipeline_mode<synchronous>, transform_indices = @transform_8, window_bounds = array<i64: 1, 128>}, {pipeline_mode = #tpu.pipeline_mode<synchronous>, transform_indices = @transform_9, window_bounds = array<i64: 32, 4>}, {pipeline_mode = #tpu.pipeline_mode<synchronous>, transform_indices = @transform_10, window_bounds = array<i64: 1, 4>}, {pipeline_mode = #tpu.pipeline_mode<synchronous>, transform_indices = @transform_11, window_bounds = array<i64: 2, 4>}, {pipeline_mode = #tpu.pipeline_mode<synchronous>, transform_indices = @transform_12, window_bounds = array<i64: 2, 2, 32>}, {pipeline_mode = #tpu.pipeline_mode<synchronous>, transform_indices = @transform_13, window_bounds = array<i64: 2, 2, 32>}]} {
    %c0_i32 = arith.constant 0 : i32
    %0 = arith.cmpi eq, %arg0, %c0_i32 : i32
    %1 = arith.extui %0 : i1 to i32
    %c0_i32_0 = arith.constant 0 : i32
    %2 = arith.cmpi ne, %1, %c0_i32_0 : i32
    scf.if %2 {
      %c0_196 = arith.constant 0 : index
      %c0_197 = arith.constant 0 : index
      %c0_198 = arith.constant 0 : index
      %560 = vector.load %arg2[%c0_196, %c0_197, %c0_198] : memref<2x2x32xf32, #tpu.memory_space<vmem>>, vector<2x2x32xf32>
      %c0_199 = arith.constant 0 : index
      %c0_200 = arith.constant 0 : index
      %c0_201 = arith.constant 0 : index
      %561 = vector.load %arg15[%c0_199, %c0_200, %c0_201] : memref<2x2x32xf32, #tpu.memory_space<vmem>>, vector<2x2x32xf32>
      tpu.vector_store %arg15[%c0_199, %c0_200, %c0_201], %560 {strides = array<i32>} : memref<2x2x32xf32, #tpu.memory_space<vmem>>, vector<2x2x32xf32>,
      %c0_202 = arith.constant 0 : index
      %c0_203 = arith.constant 0 : index
      %c0_204 = arith.constant 0 : index
      %562 = vector.load %arg3[%c0_202, %c0_203, %c0_204] : memref<2x2x32xf32, #tpu.memory_space<vmem>>, vector<2x2x32xf32>
      %c0_205 = arith.constant 0 : index
      %c0_206 = arith.constant 0 : index
      %c0_207 = arith.constant 0 : index
      %563 = vector.load %arg16[%c0_205, %c0_206, %c0_207] : memref<2x2x32xf32, #tpu.memory_space<vmem>>, vector<2x2x32xf32>
      tpu.vector_store %arg16[%c0_205, %c0_206, %c0_207], %562 {strides = array<i32>} : memref<2x2x32xf32, #tpu.memory_space<vmem>>, vector<2x2x32xf32>,
    } else {
    }
    %c0 = arith.constant 0 : index
    %c0_1 = arith.constant 0 : index
    %3 = vector.load %arg1[%c0, %c0_1] : memref<16x16xf32, #tpu.memory_space<vmem>>, vector<16x16xf32>
    %c0_2 = arith.constant 0 : index
    %c0_3 = arith.constant 0 : index
    %4 = vector.load %arg4[%c0_2, %c0_3] : memref<16x128xf32, #tpu.memory_space<vmem>>, vector<16x128xf32>
    %cst = arith.constant dense<0.000000e+00> : vector<16x128xf32>
    %5 = tpu.matmul %3, %4, %cst {dimension_numbers = #tpu.dot_dimension_numbers<[1], [0], [0], [1], [0, 0, 1, 1], [], []>} : vector<16x16xf32>, vector<16x128xf32>, vector<16x128xf32> -> vector<16x128xf32>
    %c0_4 = arith.constant 0 : index
    %c0_5 = arith.constant 0 : index
    %6 = vector.load %arg6[%c0_4, %c0_5] : memref<1x128xf32, #tpu.memory_space<vmem>>, vector<1x128xf32>
    %7 = vector.broadcast %6 : vector<1x128xf32> to vector<16x128xf32>
    %8 = arith.addf %5, %7 : vector<16x128xf32>
    %c0_6 = arith.constant 0 : index
    %c0_7 = arith.constant 0 : index
    %9 = vector.load %arg17[%c0_6, %c0_7] : memref<16x128xf32, #tpu.memory_space<vmem>>, vector<16x128xf32>
    tpu.vector_store %arg17[%c0_6, %c0_7], %8 {strides = array<i32>} : memref<16x128xf32, #tpu.memory_space<vmem>>, vector<16x128xf32>,
    %c0_8 = arith.constant 0 : index
    %c0_9 = arith.constant 0 : index
    %c0_10 = arith.constant 0 : index
    %10 = vector.load %arg15[%c0_8, %c0_9, %c0_10] : memref<2x2x32xf32, #tpu.memory_space<vmem>>, vector<1x2x32xf32>
    %11 = vector.shape_cast %10 : vector<1x2x32xf32> to vector<2x32xf32>
    %c0_11 = arith.constant 0 : index
    %c0_12 = arith.constant 0 : index
    %c0_13 = arith.constant 0 : index
    %12 = vector.load %arg16[%c0_11, %c0_12, %c0_13] : memref<2x2x32xf32, #tpu.memory_space<vmem>>, vector<1x2x32xf32>
    %13 = vector.shape_cast %12 : vector<1x2x32xf32> to vector<2x32xf32>
    %c0_i32_14 = arith.constant 0 : i32
    %c2_i32 = arith.constant 2 : i32
    %14 = arith.muli %c0_i32_14, %c2_i32 : i32
    %15 = arith.index_cast %14 : i32 to index
    %c0_15 = arith.constant 0 : index
    %16 = vector.load %arg17[%15, %c0_15] : memref<16x128xf32, #tpu.memory_space<vmem>>, vector<2x128xf32>
    %c0_16 = arith.constant 0 : index
    %c0_17 = arith.constant 0 : index
    %17 = vector.load %arg5[%c0_16, %c0_17] : memref<32x128xf32, #tpu.memory_space<vmem>>, vector<32x128xf32>
    %cst_18 = arith.constant dense<0.000000e+00> : vector<2x128xf32>
    %18 = tpu.matmul %11, %17, %cst_18 {dimension_numbers = #tpu.dot_dimension_numbers<[1], [0], [0], [1], [0, 0, 1, 1], [], []>} : vector<2x32xf32>, vector<32x128xf32>, vector<2x128xf32> -> vector<2x128xf32>
    %19 = arith.addf %16, %18 : vector<2x128xf32>
    %20 = vector.extract_strided_slice %19 {offsets = [0, 0], sizes = [2, 32], strides = [1, 1]} : vector<2x128xf32> to vector<2x32xf32>
    %21 = arith.negf %20 : vector<2x32xf32>
    %22 = math.exp %21 : vector<2x32xf32>
    %cst_19 = arith.constant 1.000000e+00 : f32
    %23 = vector.broadcast %cst_19 : f32 to vector<2x32xf32>
    %24 = arith.addf %23, %22 : vector<2x32xf32>
    %25 = arith.divf %23, %24 : vector<2x32xf32>
    %26 = vector.extract_strided_slice %19 {offsets = [0, 32], sizes = [2, 32], strides = [1, 1]} : vector<2x128xf32> to vector<2x32xf32>
    %27 = arith.negf %26 : vector<2x32xf32>
    %28 = math.exp %27 : vector<2x32xf32>
    %cst_20 = arith.constant 1.000000e+00 : f32
    %29 = vector.broadcast %cst_20 : f32 to vector<2x32xf32>
    %30 = arith.addf %29, %28 : vector<2x32xf32>
    %31 = arith.divf %29, %30 : vector<2x32xf32>
    %32 = vector.extract_strided_slice %19 {offsets = [0, 64], sizes = [2, 32], strides = [1, 1]} : vector<2x128xf32> to vector<2x32xf32>
    %33 = math.tanh %32 : vector<2x32xf32>
    %34 = vector.extract_strided_slice %19 {offsets = [0, 96], sizes = [2, 32], strides = [1, 1]} : vector<2x128xf32> to vector<2x32xf32>
    %35 = arith.negf %34 : vector<2x32xf32>
    %36 = math.exp %35 : vector<2x32xf32>
    %cst_21 = arith.constant 1.000000e+00 : f32
    %37 = vector.broadcast %cst_21 : f32 to vector<2x32xf32>
    %38 = arith.addf %37, %36 : vector<2x32xf32>
    %39 = arith.divf %37, %38 : vector<2x32xf32>
    %40 = arith.mulf %31, %13 : vector<2x32xf32>
    %41 = arith.mulf %25, %33 : vector<2x32xf32>
    %42 = arith.addf %40, %41 : vector<2x32xf32>
    %43 = math.tanh %42 : vector<2x32xf32>
    %44 = arith.mulf %39, %43 : vector<2x32xf32>
    %c2_i32_22 = arith.constant 2 : i32
    %45 = arith.muli %c0_i32_14, %c2_i32_22 : i32
    %46 = arith.index_cast %45 : i32 to index
    %c0_23 = arith.constant 0 : index
    %47 = vector.load %arg18[%46, %c0_23] : memref<16x32xf32, #tpu.memory_space<vmem>>, vector<2x32xf32>
    tpu.vector_store %arg18[%46, %c0_23], %44 {strides = array<i32>} : memref<16x32xf32, #tpu.memory_space<vmem>>, vector<2x32xf32>,
    %c1_i32 = arith.constant 1 : i32
    %c2_i32_24 = arith.constant 2 : i32
    %48 = arith.muli %c1_i32, %c2_i32_24 : i32
    %49 = arith.index_cast %48 : i32 to index
    %c0_25 = arith.constant 0 : index
    %50 = vector.load %arg17[%49, %c0_25] : memref<16x128xf32, #tpu.memory_space<vmem>>, vector<2x128xf32>
    %c0_26 = arith.constant 0 : index
    %c0_27 = arith.constant 0 : index
    %51 = vector.load %arg5[%c0_26, %c0_27] : memref<32x128xf32, #tpu.memory_space<vmem>>, vector<32x128xf32>
    %cst_28 = arith.constant dense<0.000000e+00> : vector<2x128xf32>
    %52 = tpu.matmul %44, %51, %cst_28 {dimension_numbers = #tpu.dot_dimension_numbers<[1], [0], [0], [1], [0, 0, 1, 1], [], []>} : vector<2x32xf32>, vector<32x128xf32>, vector<2x128xf32> -> vector<2x128xf32>
    %53 = arith.addf %50, %52 : vector<2x128xf32>
    %54 = vector.extract_strided_slice %53 {offsets = [0, 0], sizes = [2, 32], strides = [1, 1]} : vector<2x128xf32> to vector<2x32xf32>
    %55 = arith.negf %54 : vector<2x32xf32>
    %56 = math.exp %55 : vector<2x32xf32>
    %cst_29 = arith.constant 1.000000e+00 : f32
    %57 = vector.broadcast %cst_29 : f32 to vector<2x32xf32>
    %58 = arith.addf %57, %56 : vector<2x32xf32>
    %59 = arith.divf %57, %58 : vector<2x32xf32>
    %60 = vector.extract_strided_slice %53 {offsets = [0, 32], sizes = [2, 32], strides = [1, 1]} : vector<2x128xf32> to vector<2x32xf32>
    %61 = arith.negf %60 : vector<2x32xf32>
    %62 = math.exp %61 : vector<2x32xf32>
    %cst_30 = arith.constant 1.000000e+00 : f32
    %63 = vector.broadcast %cst_30 : f32 to vector<2x32xf32>
    %64 = arith.addf %63, %62 : vector<2x32xf32>
    %65 = arith.divf %63, %64 : vector<2x32xf32>
    %66 = vector.extract_strided_slice %53 {offsets = [0, 64], sizes = [2, 32], strides = [1, 1]} : vector<2x128xf32> to vector<2x32xf32>
    %67 = math.tanh %66 : vector<2x32xf32>
    %68 = vector.extract_strided_slice %53 {offsets = [0, 96], sizes = [2, 32], strides = [1, 1]} : vector<2x128xf32> to vector<2x32xf32>
    %69 = arith.negf %68 : vector<2x32xf32>
    %70 = math.exp %69 : vector<2x32xf32>
    %cst_31 = arith.constant 1.000000e+00 : f32
    %71 = vector.broadcast %cst_31 : f32 to vector<2x32xf32>
    %72 = arith.addf %71, %70 : vector<2x32xf32>
    %73 = arith.divf %71, %72 : vector<2x32xf32>
    %74 = arith.mulf %65, %42 : vector<2x32xf32>
    %75 = arith.mulf %59, %67 : vector<2x32xf32>
    %76 = arith.addf %74, %75 : vector<2x32xf32>
    %77 = math.tanh %76 : vector<2x32xf32>
    %78 = arith.mulf %73, %77 : vector<2x32xf32>
    %c2_i32_32 = arith.constant 2 : i32
    %79 = arith.muli %c1_i32, %c2_i32_32 : i32
    %80 = arith.index_cast %79 : i32 to index
    %c0_33 = arith.constant 0 : index
    %81 = vector.load %arg18[%80, %c0_33] : memref<16x32xf32, #tpu.memory_space<vmem>>, vector<2x32xf32>
    tpu.vector_store %arg18[%80, %c0_33], %78 {strides = array<i32>} : memref<16x32xf32, #tpu.memory_space<vmem>>, vector<2x32xf32>,
    %c2_i32_34 = arith.constant 2 : i32
    %c2_i32_35 = arith.constant 2 : i32
    %82 = arith.muli %c2_i32_34, %c2_i32_35 : i32
    %83 = arith.index_cast %82 : i32 to index
    %c0_36 = arith.constant 0 : index
    %84 = vector.load %arg17[%83, %c0_36] : memref<16x128xf32, #tpu.memory_space<vmem>>, vector<2x128xf32>
    %c0_37 = arith.constant 0 : index
    %c0_38 = arith.constant 0 : index
    %85 = vector.load %arg5[%c0_37, %c0_38] : memref<32x128xf32, #tpu.memory_space<vmem>>, vector<32x128xf32>
    %cst_39 = arith.constant dense<0.000000e+00> : vector<2x128xf32>
    %86 = tpu.matmul %78, %85, %cst_39 {dimension_numbers = #tpu.dot_dimension_numbers<[1], [0], [0], [1], [0, 0, 1, 1], [], []>} : vector<2x32xf32>, vector<32x128xf32>, vector<2x128xf32> -> vector<2x128xf32>
    %87 = arith.addf %84, %86 : vector<2x128xf32>
    %88 = vector.extract_strided_slice %87 {offsets = [0, 0], sizes = [2, 32], strides = [1, 1]} : vector<2x128xf32> to vector<2x32xf32>
    %89 = arith.negf %88 : vector<2x32xf32>
    %90 = math.exp %89 : vector<2x32xf32>
    %cst_40 = arith.constant 1.000000e+00 : f32
    %91 = vector.broadcast %cst_40 : f32 to vector<2x32xf32>
    %92 = arith.addf %91, %90 : vector<2x32xf32>
    %93 = arith.divf %91, %92 : vector<2x32xf32>
    %94 = vector.extract_strided_slice %87 {offsets = [0, 32], sizes = [2, 32], strides = [1, 1]} : vector<2x128xf32> to vector<2x32xf32>
    %95 = arith.negf %94 : vector<2x32xf32>
    %96 = math.exp %95 : vector<2x32xf32>
    %cst_41 = arith.constant 1.000000e+00 : f32
    %97 = vector.broadcast %cst_41 : f32 to vector<2x32xf32>
    %98 = arith.addf %97, %96 : vector<2x32xf32>
    %99 = arith.divf %97, %98 : vector<2x32xf32>
    %100 = vector.extract_strided_slice %87 {offsets = [0, 64], sizes = [2, 32], strides = [1, 1]} : vector<2x128xf32> to vector<2x32xf32>
    %101 = math.tanh %100 : vector<2x32xf32>
    %102 = vector.extract_strided_slice %87 {offsets = [0, 96], sizes = [2, 32], strides = [1, 1]} : vector<2x128xf32> to vector<2x32xf32>
    %103 = arith.negf %102 : vector<2x32xf32>
    %104 = math.exp %103 : vector<2x32xf32>
    %cst_42 = arith.constant 1.000000e+00 : f32
    %105 = vector.broadcast %cst_42 : f32 to vector<2x32xf32>
    %106 = arith.addf %105, %104 : vector<2x32xf32>
    %107 = arith.divf %105, %106 : vector<2x32xf32>
    %108 = arith.mulf %99, %76 : vector<2x32xf32>
    %109 = arith.mulf %93, %101 : vector<2x32xf32>
    %110 = arith.addf %108, %109 : vector<2x32xf32>
    %111 = math.tanh %110 : vector<2x32xf32>
    %112 = arith.mulf %107, %111 : vector<2x32xf32>
    %c2_i32_43 = arith.constant 2 : i32
    %113 = arith.muli %c2_i32_34, %c2_i32_43 : i32
    %114 = arith.index_cast %113 : i32 to index
    %c0_44 = arith.constant 0 : index
    %115 = vector.load %arg18[%114, %c0_44] : memref<16x32xf32, #tpu.memory_space<vmem>>, vector<2x32xf32>
    tpu.vector_store %arg18[%114, %c0_44], %112 {strides = array<i32>} : memref<16x32xf32, #tpu.memory_space<vmem>>, vector<2x32xf32>,
    %c3_i32 = arith.constant 3 : i32
    %c2_i32_45 = arith.constant 2 : i32
    %116 = arith.muli %c3_i32, %c2_i32_45 : i32
    %117 = arith.index_cast %116 : i32 to index
    %c0_46 = arith.constant 0 : index
    %118 = vector.load %arg17[%117, %c0_46] : memref<16x128xf32, #tpu.memory_space<vmem>>, vector<2x128xf32>
    %c0_47 = arith.constant 0 : index
    %c0_48 = arith.constant 0 : index
    %119 = vector.load %arg5[%c0_47, %c0_48] : memref<32x128xf32, #tpu.memory_space<vmem>>, vector<32x128xf32>
    %cst_49 = arith.constant dense<0.000000e+00> : vector<2x128xf32>
    %120 = tpu.matmul %112, %119, %cst_49 {dimension_numbers = #tpu.dot_dimension_numbers<[1], [0], [0], [1], [0, 0, 1, 1], [], []>} : vector<2x32xf32>, vector<32x128xf32>, vector<2x128xf32> -> vector<2x128xf32>
    %121 = arith.addf %118, %120 : vector<2x128xf32>
    %122 = vector.extract_strided_slice %121 {offsets = [0, 0], sizes = [2, 32], strides = [1, 1]} : vector<2x128xf32> to vector<2x32xf32>
    %123 = arith.negf %122 : vector<2x32xf32>
    %124 = math.exp %123 : vector<2x32xf32>
    %cst_50 = arith.constant 1.000000e+00 : f32
    %125 = vector.broadcast %cst_50 : f32 to vector<2x32xf32>
    %126 = arith.addf %125, %124 : vector<2x32xf32>
    %127 = arith.divf %125, %126 : vector<2x32xf32>
    %128 = vector.extract_strided_slice %121 {offsets = [0, 32], sizes = [2, 32], strides = [1, 1]} : vector<2x128xf32> to vector<2x32xf32>
    %129 = arith.negf %128 : vector<2x32xf32>
    %130 = math.exp %129 : vector<2x32xf32>
    %cst_51 = arith.constant 1.000000e+00 : f32
    %131 = vector.broadcast %cst_51 : f32 to vector<2x32xf32>
    %132 = arith.addf %131, %130 : vector<2x32xf32>
    %133 = arith.divf %131, %132 : vector<2x32xf32>
    %134 = vector.extract_strided_slice %121 {offsets = [0, 64], sizes = [2, 32], strides = [1, 1]} : vector<2x128xf32> to vector<2x32xf32>
    %135 = math.tanh %134 : vector<2x32xf32>
    %136 = vector.extract_strided_slice %121 {offsets = [0, 96], sizes = [2, 32], strides = [1, 1]} : vector<2x128xf32> to vector<2x32xf32>
    %137 = arith.negf %136 : vector<2x32xf32>
    %138 = math.exp %137 : vector<2x32xf32>
    %cst_52 = arith.constant 1.000000e+00 : f32
    %139 = vector.broadcast %cst_52 : f32 to vector<2x32xf32>
    %140 = arith.addf %139, %138 : vector<2x32xf32>
    %141 = arith.divf %139, %140 : vector<2x32xf32>
    %142 = arith.mulf %133, %110 : vector<2x32xf32>
    %143 = arith.mulf %127, %135 : vector<2x32xf32>
    %144 = arith.addf %142, %143 : vector<2x32xf32>
    %145 = math.tanh %144 : vector<2x32xf32>
    %146 = arith.mulf %141, %145 : vector<2x32xf32>
    %c2_i32_53 = arith.constant 2 : i32
    %147 = arith.muli %c3_i32, %c2_i32_53 : i32
    %148 = arith.index_cast %147 : i32 to index
    %c0_54 = arith.constant 0 : index
    %149 = vector.load %arg18[%148, %c0_54] : memref<16x32xf32, #tpu.memory_space<vmem>>, vector<2x32xf32>
    tpu.vector_store %arg18[%148, %c0_54], %146 {strides = array<i32>} : memref<16x32xf32, #tpu.memory_space<vmem>>, vector<2x32xf32>,
    %c4_i32 = arith.constant 4 : i32
    %c2_i32_55 = arith.constant 2 : i32
    %150 = arith.muli %c4_i32, %c2_i32_55 : i32
    %151 = arith.index_cast %150 : i32 to index
    %c0_56 = arith.constant 0 : index
    %152 = vector.load %arg17[%151, %c0_56] : memref<16x128xf32, #tpu.memory_space<vmem>>, vector<2x128xf32>
    %c0_57 = arith.constant 0 : index
    %c0_58 = arith.constant 0 : index
    %153 = vector.load %arg5[%c0_57, %c0_58] : memref<32x128xf32, #tpu.memory_space<vmem>>, vector<32x128xf32>
    %cst_59 = arith.constant dense<0.000000e+00> : vector<2x128xf32>
    %154 = tpu.matmul %146, %153, %cst_59 {dimension_numbers = #tpu.dot_dimension_numbers<[1], [0], [0], [1], [0, 0, 1, 1], [], []>} : vector<2x32xf32>, vector<32x128xf32>, vector<2x128xf32> -> vector<2x128xf32>
    %155 = arith.addf %152, %154 : vector<2x128xf32>
    %156 = vector.extract_strided_slice %155 {offsets = [0, 0], sizes = [2, 32], strides = [1, 1]} : vector<2x128xf32> to vector<2x32xf32>
    %157 = arith.negf %156 : vector<2x32xf32>
    %158 = math.exp %157 : vector<2x32xf32>
    %cst_60 = arith.constant 1.000000e+00 : f32
    %159 = vector.broadcast %cst_60 : f32 to vector<2x32xf32>
    %160 = arith.addf %159, %158 : vector<2x32xf32>
    %161 = arith.divf %159, %160 : vector<2x32xf32>
    %162 = vector.extract_strided_slice %155 {offsets = [0, 32], sizes = [2, 32], strides = [1, 1]} : vector<2x128xf32> to vector<2x32xf32>
    %163 = arith.negf %162 : vector<2x32xf32>
    %164 = math.exp %163 : vector<2x32xf32>
    %cst_61 = arith.constant 1.000000e+00 : f32
    %165 = vector.broadcast %cst_61 : f32 to vector<2x32xf32>
    %166 = arith.addf %165, %164 : vector<2x32xf32>
    %167 = arith.divf %165, %166 : vector<2x32xf32>
    %168 = vector.extract_strided_slice %155 {offsets = [0, 64], sizes = [2, 32], strides = [1, 1]} : vector<2x128xf32> to vector<2x32xf32>
    %169 = math.tanh %168 : vector<2x32xf32>
    %170 = vector.extract_strided_slice %155 {offsets = [0, 96], sizes = [2, 32], strides = [1, 1]} : vector<2x128xf32> to vector<2x32xf32>
    %171 = arith.negf %170 : vector<2x32xf32>
    %172 = math.exp %171 : vector<2x32xf32>
    %cst_62 = arith.constant 1.000000e+00 : f32
    %173 = vector.broadcast %cst_62 : f32 to vector<2x32xf32>
    %174 = arith.addf %173, %172 : vector<2x32xf32>
    %175 = arith.divf %173, %174 : vector<2x32xf32>
    %176 = arith.mulf %167, %144 : vector<2x32xf32>
    %177 = arith.mulf %161, %169 : vector<2x32xf32>
    %178 = arith.addf %176, %177 : vector<2x32xf32>
    %179 = math.tanh %178 : vector<2x32xf32>
    %180 = arith.mulf %175, %179 : vector<2x32xf32>
    %c2_i32_63 = arith.constant 2 : i32
    %181 = arith.muli %c4_i32, %c2_i32_63 : i32
    %182 = arith.index_cast %181 : i32 to index
    %c0_64 = arith.constant 0 : index
    %183 = vector.load %arg18[%182, %c0_64] : memref<16x32xf32, #tpu.memory_space<vmem>>, vector<2x32xf32>
    tpu.vector_store %arg18[%182, %c0_64], %180 {strides = array<i32>} : memref<16x32xf32, #tpu.memory_space<vmem>>, vector<2x32xf32>,
    %c5_i32 = arith.constant 5 : i32
    %c2_i32_65 = arith.constant 2 : i32
    %184 = arith.muli %c5_i32, %c2_i32_65 : i32
    %185 = arith.index_cast %184 : i32 to index
    %c0_66 = arith.constant 0 : index
    %186 = vector.load %arg17[%185, %c0_66] : memref<16x128xf32, #tpu.memory_space<vmem>>, vector<2x128xf32>
    %c0_67 = arith.constant 0 : index
    %c0_68 = arith.constant 0 : index
    %187 = vector.load %arg5[%c0_67, %c0_68] : memref<32x128xf32, #tpu.memory_space<vmem>>, vector<32x128xf32>
    %cst_69 = arith.constant dense<0.000000e+00> : vector<2x128xf32>
    %188 = tpu.matmul %180, %187, %cst_69 {dimension_numbers = #tpu.dot_dimension_numbers<[1], [0], [0], [1], [0, 0, 1, 1], [], []>} : vector<2x32xf32>, vector<32x128xf32>, vector<2x128xf32> -> vector<2x128xf32>
    %189 = arith.addf %186, %188 : vector<2x128xf32>
    %190 = vector.extract_strided_slice %189 {offsets = [0, 0], sizes = [2, 32], strides = [1, 1]} : vector<2x128xf32> to vector<2x32xf32>
    %191 = arith.negf %190 : vector<2x32xf32>
    %192 = math.exp %191 : vector<2x32xf32>
    %cst_70 = arith.constant 1.000000e+00 : f32
    %193 = vector.broadcast %cst_70 : f32 to vector<2x32xf32>
    %194 = arith.addf %193, %192 : vector<2x32xf32>
    %195 = arith.divf %193, %194 : vector<2x32xf32>
    %196 = vector.extract_strided_slice %189 {offsets = [0, 32], sizes = [2, 32], strides = [1, 1]} : vector<2x128xf32> to vector<2x32xf32>
    %197 = arith.negf %196 : vector<2x32xf32>
    %198 = math.exp %197 : vector<2x32xf32>
    %cst_71 = arith.constant 1.000000e+00 : f32
    %199 = vector.broadcast %cst_71 : f32 to vector<2x32xf32>
    %200 = arith.addf %199, %198 : vector<2x32xf32>
    %201 = arith.divf %199, %200 : vector<2x32xf32>
    %202 = vector.extract_strided_slice %189 {offsets = [0, 64], sizes = [2, 32], strides = [1, 1]} : vector<2x128xf32> to vector<2x32xf32>
    %203 = math.tanh %202 : vector<2x32xf32>
    %204 = vector.extract_strided_slice %189 {offsets = [0, 96], sizes = [2, 32], strides = [1, 1]} : vector<2x128xf32> to vector<2x32xf32>
    %205 = arith.negf %204 : vector<2x32xf32>
    %206 = math.exp %205 : vector<2x32xf32>
    %cst_72 = arith.constant 1.000000e+00 : f32
    %207 = vector.broadcast %cst_72 : f32 to vector<2x32xf32>
    %208 = arith.addf %207, %206 : vector<2x32xf32>
    %209 = arith.divf %207, %208 : vector<2x32xf32>
    %210 = arith.mulf %201, %178 : vector<2x32xf32>
    %211 = arith.mulf %195, %203 : vector<2x32xf32>
    %212 = arith.addf %210, %211 : vector<2x32xf32>
    %213 = math.tanh %212 : vector<2x32xf32>
    %214 = arith.mulf %209, %213 : vector<2x32xf32>
    %c2_i32_73 = arith.constant 2 : i32
    %215 = arith.muli %c5_i32, %c2_i32_73 : i32
    %216 = arith.index_cast %215 : i32 to index
    %c0_74 = arith.constant 0 : index
    %217 = vector.load %arg18[%216, %c0_74] : memref<16x32xf32, #tpu.memory_space<vmem>>, vector<2x32xf32>
    tpu.vector_store %arg18[%216, %c0_74], %214 {strides = array<i32>} : memref<16x32xf32, #tpu.memory_space<vmem>>, vector<2x32xf32>,
    %c6_i32 = arith.constant 6 : i32
    %c2_i32_75 = arith.constant 2 : i32
    %218 = arith.muli %c6_i32, %c2_i32_75 : i32
    %219 = arith.index_cast %218 : i32 to index
    %c0_76 = arith.constant 0 : index
    %220 = vector.load %arg17[%219, %c0_76] : memref<16x128xf32, #tpu.memory_space<vmem>>, vector<2x128xf32>
    %c0_77 = arith.constant 0 : index
    %c0_78 = arith.constant 0 : index
    %221 = vector.load %arg5[%c0_77, %c0_78] : memref<32x128xf32, #tpu.memory_space<vmem>>, vector<32x128xf32>
    %cst_79 = arith.constant dense<0.000000e+00> : vector<2x128xf32>
    %222 = tpu.matmul %214, %221, %cst_79 {dimension_numbers = #tpu.dot_dimension_numbers<[1], [0], [0], [1], [0, 0, 1, 1], [], []>} : vector<2x32xf32>, vector<32x128xf32>, vector<2x128xf32> -> vector<2x128xf32>
    %223 = arith.addf %220, %222 : vector<2x128xf32>
    %224 = vector.extract_strided_slice %223 {offsets = [0, 0], sizes = [2, 32], strides = [1, 1]} : vector<2x128xf32> to vector<2x32xf32>
    %225 = arith.negf %224 : vector<2x32xf32>
    %226 = math.exp %225 : vector<2x32xf32>
    %cst_80 = arith.constant 1.000000e+00 : f32
    %227 = vector.broadcast %cst_80 : f32 to vector<2x32xf32>
    %228 = arith.addf %227, %226 : vector<2x32xf32>
    %229 = arith.divf %227, %228 : vector<2x32xf32>
    %230 = vector.extract_strided_slice %223 {offsets = [0, 32], sizes = [2, 32], strides = [1, 1]} : vector<2x128xf32> to vector<2x32xf32>
    %231 = arith.negf %230 : vector<2x32xf32>
    %232 = math.exp %231 : vector<2x32xf32>
    %cst_81 = arith.constant 1.000000e+00 : f32
    %233 = vector.broadcast %cst_81 : f32 to vector<2x32xf32>
    %234 = arith.addf %233, %232 : vector<2x32xf32>
    %235 = arith.divf %233, %234 : vector<2x32xf32>
    %236 = vector.extract_strided_slice %223 {offsets = [0, 64], sizes = [2, 32], strides = [1, 1]} : vector<2x128xf32> to vector<2x32xf32>
    %237 = math.tanh %236 : vector<2x32xf32>
    %238 = vector.extract_strided_slice %223 {offsets = [0, 96], sizes = [2, 32], strides = [1, 1]} : vector<2x128xf32> to vector<2x32xf32>
    %239 = arith.negf %238 : vector<2x32xf32>
    %240 = math.exp %239 : vector<2x32xf32>
    %cst_82 = arith.constant 1.000000e+00 : f32
    %241 = vector.broadcast %cst_82 : f32 to vector<2x32xf32>
    %242 = arith.addf %241, %240 : vector<2x32xf32>
    %243 = arith.divf %241, %242 : vector<2x32xf32>
    %244 = arith.mulf %235, %212 : vector<2x32xf32>
    %245 = arith.mulf %229, %237 : vector<2x32xf32>
    %246 = arith.addf %244, %245 : vector<2x32xf32>
    %247 = math.tanh %246 : vector<2x32xf32>
    %248 = arith.mulf %243, %247 : vector<2x32xf32>
    %c2_i32_83 = arith.constant 2 : i32
    %249 = arith.muli %c6_i32, %c2_i32_83 : i32
    %250 = arith.index_cast %249 : i32 to index
    %c0_84 = arith.constant 0 : index
    %251 = vector.load %arg18[%250, %c0_84] : memref<16x32xf32, #tpu.memory_space<vmem>>, vector<2x32xf32>
    tpu.vector_store %arg18[%250, %c0_84], %248 {strides = array<i32>} : memref<16x32xf32, #tpu.memory_space<vmem>>, vector<2x32xf32>,
    %c7_i32 = arith.constant 7 : i32
    %c2_i32_85 = arith.constant 2 : i32
    %252 = arith.muli %c7_i32, %c2_i32_85 : i32
    %253 = arith.index_cast %252 : i32 to index
    %c0_86 = arith.constant 0 : index
    %254 = vector.load %arg17[%253, %c0_86] : memref<16x128xf32, #tpu.memory_space<vmem>>, vector<2x128xf32>
    %c0_87 = arith.constant 0 : index
    %c0_88 = arith.constant 0 : index
    %255 = vector.load %arg5[%c0_87, %c0_88] : memref<32x128xf32, #tpu.memory_space<vmem>>, vector<32x128xf32>
    %cst_89 = arith.constant dense<0.000000e+00> : vector<2x128xf32>
    %256 = tpu.matmul %248, %255, %cst_89 {dimension_numbers = #tpu.dot_dimension_numbers<[1], [0], [0], [1], [0, 0, 1, 1], [], []>} : vector<2x32xf32>, vector<32x128xf32>, vector<2x128xf32> -> vector<2x128xf32>
    %257 = arith.addf %254, %256 : vector<2x128xf32>
    %258 = vector.extract_strided_slice %257 {offsets = [0, 0], sizes = [2, 32], strides = [1, 1]} : vector<2x128xf32> to vector<2x32xf32>
    %259 = arith.negf %258 : vector<2x32xf32>
    %260 = math.exp %259 : vector<2x32xf32>
    %cst_90 = arith.constant 1.000000e+00 : f32
    %261 = vector.broadcast %cst_90 : f32 to vector<2x32xf32>
    %262 = arith.addf %261, %260 : vector<2x32xf32>
    %263 = arith.divf %261, %262 : vector<2x32xf32>
    %264 = vector.extract_strided_slice %257 {offsets = [0, 32], sizes = [2, 32], strides = [1, 1]} : vector<2x128xf32> to vector<2x32xf32>
    %265 = arith.negf %264 : vector<2x32xf32>
    %266 = math.exp %265 : vector<2x32xf32>
    %cst_91 = arith.constant 1.000000e+00 : f32
    %267 = vector.broadcast %cst_91 : f32 to vector<2x32xf32>
    %268 = arith.addf %267, %266 : vector<2x32xf32>
    %269 = arith.divf %267, %268 : vector<2x32xf32>
    %270 = vector.extract_strided_slice %257 {offsets = [0, 64], sizes = [2, 32], strides = [1, 1]} : vector<2x128xf32> to vector<2x32xf32>
    %271 = math.tanh %270 : vector<2x32xf32>
    %272 = vector.extract_strided_slice %257 {offsets = [0, 96], sizes = [2, 32], strides = [1, 1]} : vector<2x128xf32> to vector<2x32xf32>
    %273 = arith.negf %272 : vector<2x32xf32>
    %274 = math.exp %273 : vector<2x32xf32>
    %cst_92 = arith.constant 1.000000e+00 : f32
    %275 = vector.broadcast %cst_92 : f32 to vector<2x32xf32>
    %276 = arith.addf %275, %274 : vector<2x32xf32>
    %277 = arith.divf %275, %276 : vector<2x32xf32>
    %278 = arith.mulf %269, %246 : vector<2x32xf32>
    %279 = arith.mulf %263, %271 : vector<2x32xf32>
    %280 = arith.addf %278, %279 : vector<2x32xf32>
    %281 = math.tanh %280 : vector<2x32xf32>
    %282 = arith.mulf %277, %281 : vector<2x32xf32>
    %c2_i32_93 = arith.constant 2 : i32
    %283 = arith.muli %c7_i32, %c2_i32_93 : i32
    %284 = arith.index_cast %283 : i32 to index
    %c0_94 = arith.constant 0 : index
    %285 = vector.load %arg18[%284, %c0_94] : memref<16x32xf32, #tpu.memory_space<vmem>>, vector<2x32xf32>
    tpu.vector_store %arg18[%284, %c0_94], %282 {strides = array<i32>} : memref<16x32xf32, #tpu.memory_space<vmem>>, vector<2x32xf32>,
    %c8_i32 = arith.constant 8 : i32
    %c0_95 = arith.constant 0 : index
    %c0_96 = arith.constant 0 : index
    %c0_97 = arith.constant 0 : index
    %286 = vector.load %arg15[%c0_95, %c0_96, %c0_97] : memref<2x2x32xf32, #tpu.memory_space<vmem>>, vector<1x2x32xf32>
    %287 = vector.shape_cast %286 : vector<1x2x32xf32> to vector<2x32xf32>
    %288 = vector.shape_cast %282 : vector<2x32xf32> to vector<1x2x32xf32>
    tpu.vector_store %arg15[%c0_95, %c0_96, %c0_97], %288 {strides = array<i32>} : memref<2x2x32xf32, #tpu.memory_space<vmem>>, vector<1x2x32xf32>,
    %c0_98 = arith.constant 0 : index
    %c0_99 = arith.constant 0 : index
    %c0_100 = arith.constant 0 : index
    %289 = vector.load %arg16[%c0_98, %c0_99, %c0_100] : memref<2x2x32xf32, #tpu.memory_space<vmem>>, vector<1x2x32xf32>
    %290 = vector.shape_cast %289 : vector<1x2x32xf32> to vector<2x32xf32>
    %291 = vector.shape_cast %280 : vector<2x32xf32> to vector<1x2x32xf32>
    tpu.vector_store %arg16[%c0_98, %c0_99, %c0_100], %291 {strides = array<i32>} : memref<2x2x32xf32, #tpu.memory_space<vmem>>, vector<1x2x32xf32>,
    %c0_101 = arith.constant 0 : index
    %c0_102 = arith.constant 0 : index
    %292 = vector.load %arg18[%c0_101, %c0_102] : memref<16x32xf32, #tpu.memory_space<vmem>>, vector<16x32xf32>
    %c0_103 = arith.constant 0 : index
    %c0_104 = arith.constant 0 : index
    %293 = vector.load %arg7[%c0_103, %c0_104] : memref<32x128xf32, #tpu.memory_space<vmem>>, vector<32x128xf32>
    %cst_105 = arith.constant dense<0.000000e+00> : vector<16x128xf32>
    %294 = tpu.matmul %292, %293, %cst_105 {dimension_numbers = #tpu.dot_dimension_numbers<[1], [0], [0], [1], [0, 0, 1, 1], [], []>} : vector<16x32xf32>, vector<32x128xf32>, vector<16x128xf32> -> vector<16x128xf32>
    %c0_106 = arith.constant 0 : index
    %c0_107 = arith.constant 0 : index
    %295 = vector.load %arg9[%c0_106, %c0_107] : memref<1x128xf32, #tpu.memory_space<vmem>>, vector<1x128xf32>
    %296 = vector.broadcast %295 : vector<1x128xf32> to vector<16x128xf32>
    %297 = arith.addf %294, %296 : vector<16x128xf32>
    %c0_108 = arith.constant 0 : index
    %c0_109 = arith.constant 0 : index
    %298 = vector.load %arg17[%c0_108, %c0_109] : memref<16x128xf32, #tpu.memory_space<vmem>>, vector<16x128xf32>
    tpu.vector_store %arg17[%c0_108, %c0_109], %297 {strides = array<i32>} : memref<16x128xf32, #tpu.memory_space<vmem>>, vector<16x128xf32>,
    %c1 = arith.constant 1 : index
    %c0_110 = arith.constant 0 : index
    %c0_111 = arith.constant 0 : index
    %299 = vector.load %arg15[%c1, %c0_110, %c0_111] : memref<2x2x32xf32, #tpu.memory_space<vmem>>, vector<1x2x32xf32>
    %300 = vector.shape_cast %299 : vector<1x2x32xf32> to vector<2x32xf32>
    %c1_112 = arith.constant 1 : index
    %c0_113 = arith.constant 0 : index
    %c0_114 = arith.constant 0 : index
    %301 = vector.load %arg16[%c1_112, %c0_113, %c0_114] : memref<2x2x32xf32, #tpu.memory_space<vmem>>, vector<1x2x32xf32>
    %302 = vector.shape_cast %301 : vector<1x2x32xf32> to vector<2x32xf32>
    %c0_i32_115 = arith.constant 0 : i32
    %c2_i32_116 = arith.constant 2 : i32
    %303 = arith.muli %c0_i32_115, %c2_i32_116 : i32
    %304 = arith.index_cast %303 : i32 to index
    %c0_117 = arith.constant 0 : index
    %305 = vector.load %arg17[%304, %c0_117] : memref<16x128xf32, #tpu.memory_space<vmem>>, vector<2x128xf32>
    %c0_118 = arith.constant 0 : index
    %c0_119 = arith.constant 0 : index
    %306 = vector.load %arg8[%c0_118, %c0_119] : memref<32x128xf32, #tpu.memory_space<vmem>>, vector<32x128xf32>
    %cst_120 = arith.constant dense<0.000000e+00> : vector<2x128xf32>
    %307 = tpu.matmul %300, %306, %cst_120 {dimension_numbers = #tpu.dot_dimension_numbers<[1], [0], [0], [1], [0, 0, 1, 1], [], []>} : vector<2x32xf32>, vector<32x128xf32>, vector<2x128xf32> -> vector<2x128xf32>
    %308 = arith.addf %305, %307 : vector<2x128xf32>
    %309 = vector.extract_strided_slice %308 {offsets = [0, 0], sizes = [2, 32], strides = [1, 1]} : vector<2x128xf32> to vector<2x32xf32>
    %310 = arith.negf %309 : vector<2x32xf32>
    %311 = math.exp %310 : vector<2x32xf32>
    %cst_121 = arith.constant 1.000000e+00 : f32
    %312 = vector.broadcast %cst_121 : f32 to vector<2x32xf32>
    %313 = arith.addf %312, %311 : vector<2x32xf32>
    %314 = arith.divf %312, %313 : vector<2x32xf32>
    %315 = vector.extract_strided_slice %308 {offsets = [0, 32], sizes = [2, 32], strides = [1, 1]} : vector<2x128xf32> to vector<2x32xf32>
    %316 = arith.negf %315 : vector<2x32xf32>
    %317 = math.exp %316 : vector<2x32xf32>
    %cst_122 = arith.constant 1.000000e+00 : f32
    %318 = vector.broadcast %cst_122 : f32 to vector<2x32xf32>
    %319 = arith.addf %318, %317 : vector<2x32xf32>
    %320 = arith.divf %318, %319 : vector<2x32xf32>
    %321 = vector.extract_strided_slice %308 {offsets = [0, 64], sizes = [2, 32], strides = [1, 1]} : vector<2x128xf32> to vector<2x32xf32>
    %322 = math.tanh %321 : vector<2x32xf32>
    %323 = vector.extract_strided_slice %308 {offsets = [0, 96], sizes = [2, 32], strides = [1, 1]} : vector<2x128xf32> to vector<2x32xf32>
    %324 = arith.negf %323 : vector<2x32xf32>
    %325 = math.exp %324 : vector<2x32xf32>
    %cst_123 = arith.constant 1.000000e+00 : f32
    %326 = vector.broadcast %cst_123 : f32 to vector<2x32xf32>
    %327 = arith.addf %326, %325 : vector<2x32xf32>
    %328 = arith.divf %326, %327 : vector<2x32xf32>
    %329 = arith.mulf %320, %302 : vector<2x32xf32>
    %330 = arith.mulf %314, %322 : vector<2x32xf32>
    %331 = arith.addf %329, %330 : vector<2x32xf32>
    %332 = math.tanh %331 : vector<2x32xf32>
    %333 = arith.mulf %328, %332 : vector<2x32xf32>
    %c1_i32_124 = arith.constant 1 : i32
    %c2_i32_125 = arith.constant 2 : i32
    %334 = arith.muli %c1_i32_124, %c2_i32_125 : i32
    %335 = arith.index_cast %334 : i32 to index
    %c0_126 = arith.constant 0 : index
    %336 = vector.load %arg17[%335, %c0_126] : memref<16x128xf32, #tpu.memory_space<vmem>>, vector<2x128xf32>
    %c0_127 = arith.constant 0 : index
    %c0_128 = arith.constant 0 : index
    %337 = vector.load %arg8[%c0_127, %c0_128] : memref<32x128xf32, #tpu.memory_space<vmem>>, vector<32x128xf32>
    %cst_129 = arith.constant dense<0.000000e+00> : vector<2x128xf32>
    %338 = tpu.matmul %333, %337, %cst_129 {dimension_numbers = #tpu.dot_dimension_numbers<[1], [0], [0], [1], [0, 0, 1, 1], [], []>} : vector<2x32xf32>, vector<32x128xf32>, vector<2x128xf32> -> vector<2x128xf32>
    %339 = arith.addf %336, %338 : vector<2x128xf32>
    %340 = vector.extract_strided_slice %339 {offsets = [0, 0], sizes = [2, 32], strides = [1, 1]} : vector<2x128xf32> to vector<2x32xf32>
    %341 = arith.negf %340 : vector<2x32xf32>
    %342 = math.exp %341 : vector<2x32xf32>
    %cst_130 = arith.constant 1.000000e+00 : f32
    %343 = vector.broadcast %cst_130 : f32 to vector<2x32xf32>
    %344 = arith.addf %343, %342 : vector<2x32xf32>
    %345 = arith.divf %343, %344 : vector<2x32xf32>
    %346 = vector.extract_strided_slice %339 {offsets = [0, 32], sizes = [2, 32], strides = [1, 1]} : vector<2x128xf32> to vector<2x32xf32>
    %347 = arith.negf %346 : vector<2x32xf32>
    %348 = math.exp %347 : vector<2x32xf32>
    %cst_131 = arith.constant 1.000000e+00 : f32
    %349 = vector.broadcast %cst_131 : f32 to vector<2x32xf32>
    %350 = arith.addf %349, %348 : vector<2x32xf32>
    %351 = arith.divf %349, %350 : vector<2x32xf32>
    %352 = vector.extract_strided_slice %339 {offsets = [0, 64], sizes = [2, 32], strides = [1, 1]} : vector<2x128xf32> to vector<2x32xf32>
    %353 = math.tanh %352 : vector<2x32xf32>
    %354 = vector.extract_strided_slice %339 {offsets = [0, 96], sizes = [2, 32], strides = [1, 1]} : vector<2x128xf32> to vector<2x32xf32>
    %355 = arith.negf %354 : vector<2x32xf32>
    %356 = math.exp %355 : vector<2x32xf32>
    %cst_132 = arith.constant 1.000000e+00 : f32
    %357 = vector.broadcast %cst_132 : f32 to vector<2x32xf32>
    %358 = arith.addf %357, %356 : vector<2x32xf32>
    %359 = arith.divf %357, %358 : vector<2x32xf32>
    %360 = arith.mulf %351, %331 : vector<2x32xf32>
    %361 = arith.mulf %345, %353 : vector<2x32xf32>
    %362 = arith.addf %360, %361 : vector<2x32xf32>
    %363 = math.tanh %362 : vector<2x32xf32>
    %364 = arith.mulf %359, %363 : vector<2x32xf32>
    %c2_i32_133 = arith.constant 2 : i32
    %c2_i32_134 = arith.constant 2 : i32
    %365 = arith.muli %c2_i32_133, %c2_i32_134 : i32
    %366 = arith.index_cast %365 : i32 to index
    %c0_135 = arith.constant 0 : index
    %367 = vector.load %arg17[%366, %c0_135] : memref<16x128xf32, #tpu.memory_space<vmem>>, vector<2x128xf32>
    %c0_136 = arith.constant 0 : index
    %c0_137 = arith.constant 0 : index
    %368 = vector.load %arg8[%c0_136, %c0_137] : memref<32x128xf32, #tpu.memory_space<vmem>>, vector<32x128xf32>
    %cst_138 = arith.constant dense<0.000000e+00> : vector<2x128xf32>
    %369 = tpu.matmul %364, %368, %cst_138 {dimension_numbers = #tpu.dot_dimension_numbers<[1], [0], [0], [1], [0, 0, 1, 1], [], []>} : vector<2x32xf32>, vector<32x128xf32>, vector<2x128xf32> -> vector<2x128xf32>
    %370 = arith.addf %367, %369 : vector<2x128xf32>
    %371 = vector.extract_strided_slice %370 {offsets = [0, 0], sizes = [2, 32], strides = [1, 1]} : vector<2x128xf32> to vector<2x32xf32>
    %372 = arith.negf %371 : vector<2x32xf32>
    %373 = math.exp %372 : vector<2x32xf32>
    %cst_139 = arith.constant 1.000000e+00 : f32
    %374 = vector.broadcast %cst_139 : f32 to vector<2x32xf32>
    %375 = arith.addf %374, %373 : vector<2x32xf32>
    %376 = arith.divf %374, %375 : vector<2x32xf32>
    %377 = vector.extract_strided_slice %370 {offsets = [0, 32], sizes = [2, 32], strides = [1, 1]} : vector<2x128xf32> to vector<2x32xf32>
    %378 = arith.negf %377 : vector<2x32xf32>
    %379 = math.exp %378 : vector<2x32xf32>
    %cst_140 = arith.constant 1.000000e+00 : f32
    %380 = vector.broadcast %cst_140 : f32 to vector<2x32xf32>
    %381 = arith.addf %380, %379 : vector<2x32xf32>
    %382 = arith.divf %380, %381 : vector<2x32xf32>
    %383 = vector.extract_strided_slice %370 {offsets = [0, 64], sizes = [2, 32], strides = [1, 1]} : vector<2x128xf32> to vector<2x32xf32>
    %384 = math.tanh %383 : vector<2x32xf32>
    %385 = vector.extract_strided_slice %370 {offsets = [0, 96], sizes = [2, 32], strides = [1, 1]} : vector<2x128xf32> to vector<2x32xf32>
    %386 = arith.negf %385 : vector<2x32xf32>
    %387 = math.exp %386 : vector<2x32xf32>
    %cst_141 = arith.constant 1.000000e+00 : f32
    %388 = vector.broadcast %cst_141 : f32 to vector<2x32xf32>
    %389 = arith.addf %388, %387 : vector<2x32xf32>
    %390 = arith.divf %388, %389 : vector<2x32xf32>
    %391 = arith.mulf %382, %362 : vector<2x32xf32>
    %392 = arith.mulf %376, %384 : vector<2x32xf32>
    %393 = arith.addf %391, %392 : vector<2x32xf32>
    %394 = math.tanh %393 : vector<2x32xf32>
    %395 = arith.mulf %390, %394 : vector<2x32xf32>
    %c3_i32_142 = arith.constant 3 : i32
    %c2_i32_143 = arith.constant 2 : i32
    %396 = arith.muli %c3_i32_142, %c2_i32_143 : i32
    %397 = arith.index_cast %396 : i32 to index
    %c0_144 = arith.constant 0 : index
    %398 = vector.load %arg17[%397, %c0_144] : memref<16x128xf32, #tpu.memory_space<vmem>>, vector<2x128xf32>
    %c0_145 = arith.constant 0 : index
    %c0_146 = arith.constant 0 : index
    %399 = vector.load %arg8[%c0_145, %c0_146] : memref<32x128xf32, #tpu.memory_space<vmem>>, vector<32x128xf32>
    %cst_147 = arith.constant dense<0.000000e+00> : vector<2x128xf32>
    %400 = tpu.matmul %395, %399, %cst_147 {dimension_numbers = #tpu.dot_dimension_numbers<[1], [0], [0], [1], [0, 0, 1, 1], [], []>} : vector<2x32xf32>, vector<32x128xf32>, vector<2x128xf32> -> vector<2x128xf32>
    %401 = arith.addf %398, %400 : vector<2x128xf32>
    %402 = vector.extract_strided_slice %401 {offsets = [0, 0], sizes = [2, 32], strides = [1, 1]} : vector<2x128xf32> to vector<2x32xf32>
    %403 = arith.negf %402 : vector<2x32xf32>
    %404 = math.exp %403 : vector<2x32xf32>
    %cst_148 = arith.constant 1.000000e+00 : f32
    %405 = vector.broadcast %cst_148 : f32 to vector<2x32xf32>
    %406 = arith.addf %405, %404 : vector<2x32xf32>
    %407 = arith.divf %405, %406 : vector<2x32xf32>
    %408 = vector.extract_strided_slice %401 {offsets = [0, 32], sizes = [2, 32], strides = [1, 1]} : vector<2x128xf32> to vector<2x32xf32>
    %409 = arith.negf %408 : vector<2x32xf32>
    %410 = math.exp %409 : vector<2x32xf32>
    %cst_149 = arith.constant 1.000000e+00 : f32
    %411 = vector.broadcast %cst_149 : f32 to vector<2x32xf32>
    %412 = arith.addf %411, %410 : vector<2x32xf32>
    %413 = arith.divf %411, %412 : vector<2x32xf32>
    %414 = vector.extract_strided_slice %401 {offsets = [0, 64], sizes = [2, 32], strides = [1, 1]} : vector<2x128xf32> to vector<2x32xf32>
    %415 = math.tanh %414 : vector<2x32xf32>
    %416 = vector.extract_strided_slice %401 {offsets = [0, 96], sizes = [2, 32], strides = [1, 1]} : vector<2x128xf32> to vector<2x32xf32>
    %417 = arith.negf %416 : vector<2x32xf32>
    %418 = math.exp %417 : vector<2x32xf32>
    %cst_150 = arith.constant 1.000000e+00 : f32
    %419 = vector.broadcast %cst_150 : f32 to vector<2x32xf32>
    %420 = arith.addf %419, %418 : vector<2x32xf32>
    %421 = arith.divf %419, %420 : vector<2x32xf32>
    %422 = arith.mulf %413, %393 : vector<2x32xf32>
    %423 = arith.mulf %407, %415 : vector<2x32xf32>
    %424 = arith.addf %422, %423 : vector<2x32xf32>
    %425 = math.tanh %424 : vector<2x32xf32>
    %426 = arith.mulf %421, %425 : vector<2x32xf32>
    %c4_i32_151 = arith.constant 4 : i32
    %c2_i32_152 = arith.constant 2 : i32
    %427 = arith.muli %c4_i32_151, %c2_i32_152 : i32
    %428 = arith.index_cast %427 : i32 to index
    %c0_153 = arith.constant 0 : index
    %429 = vector.load %arg17[%428, %c0_153] : memref<16x128xf32, #tpu.memory_space<vmem>>, vector<2x128xf32>
    %c0_154 = arith.constant 0 : index
    %c0_155 = arith.constant 0 : index
    %430 = vector.load %arg8[%c0_154, %c0_155] : memref<32x128xf32, #tpu.memory_space<vmem>>, vector<32x128xf32>
    %cst_156 = arith.constant dense<0.000000e+00> : vector<2x128xf32>
    %431 = tpu.matmul %426, %430, %cst_156 {dimension_numbers = #tpu.dot_dimension_numbers<[1], [0], [0], [1], [0, 0, 1, 1], [], []>} : vector<2x32xf32>, vector<32x128xf32>, vector<2x128xf32> -> vector<2x128xf32>
    %432 = arith.addf %429, %431 : vector<2x128xf32>
    %433 = vector.extract_strided_slice %432 {offsets = [0, 0], sizes = [2, 32], strides = [1, 1]} : vector<2x128xf32> to vector<2x32xf32>
    %434 = arith.negf %433 : vector<2x32xf32>
    %435 = math.exp %434 : vector<2x32xf32>
    %cst_157 = arith.constant 1.000000e+00 : f32
    %436 = vector.broadcast %cst_157 : f32 to vector<2x32xf32>
    %437 = arith.addf %436, %435 : vector<2x32xf32>
    %438 = arith.divf %436, %437 : vector<2x32xf32>
    %439 = vector.extract_strided_slice %432 {offsets = [0, 32], sizes = [2, 32], strides = [1, 1]} : vector<2x128xf32> to vector<2x32xf32>
    %440 = arith.negf %439 : vector<2x32xf32>
    %441 = math.exp %440 : vector<2x32xf32>
    %cst_158 = arith.constant 1.000000e+00 : f32
    %442 = vector.broadcast %cst_158 : f32 to vector<2x32xf32>
    %443 = arith.addf %442, %441 : vector<2x32xf32>
    %444 = arith.divf %442, %443 : vector<2x32xf32>
    %445 = vector.extract_strided_slice %432 {offsets = [0, 64], sizes = [2, 32], strides = [1, 1]} : vector<2x128xf32> to vector<2x32xf32>
    %446 = math.tanh %445 : vector<2x32xf32>
    %447 = vector.extract_strided_slice %432 {offsets = [0, 96], sizes = [2, 32], strides = [1, 1]} : vector<2x128xf32> to vector<2x32xf32>
    %448 = arith.negf %447 : vector<2x32xf32>
    %449 = math.exp %448 : vector<2x32xf32>
    %cst_159 = arith.constant 1.000000e+00 : f32
    %450 = vector.broadcast %cst_159 : f32 to vector<2x32xf32>
    %451 = arith.addf %450, %449 : vector<2x32xf32>
    %452 = arith.divf %450, %451 : vector<2x32xf32>
    %453 = arith.mulf %444, %424 : vector<2x32xf32>
    %454 = arith.mulf %438, %446 : vector<2x32xf32>
    %455 = arith.addf %453, %454 : vector<2x32xf32>
    %456 = math.tanh %455 : vector<2x32xf32>
    %457 = arith.mulf %452, %456 : vector<2x32xf32>
    %c5_i32_160 = arith.constant 5 : i32
    %c2_i32_161 = arith.constant 2 : i32
    %458 = arith.muli %c5_i32_160, %c2_i32_161 : i32
    %459 = arith.index_cast %458 : i32 to index
    %c0_162 = arith.constant 0 : index
    %460 = vector.load %arg17[%459, %c0_162] : memref<16x128xf32, #tpu.memory_space<vmem>>, vector<2x128xf32>
    %c0_163 = arith.constant 0 : index
    %c0_164 = arith.constant 0 : index
    %461 = vector.load %arg8[%c0_163, %c0_164] : memref<32x128xf32, #tpu.memory_space<vmem>>, vector<32x128xf32>
    %cst_165 = arith.constant dense<0.000000e+00> : vector<2x128xf32>
    %462 = tpu.matmul %457, %461, %cst_165 {dimension_numbers = #tpu.dot_dimension_numbers<[1], [0], [0], [1], [0, 0, 1, 1], [], []>} : vector<2x32xf32>, vector<32x128xf32>, vector<2x128xf32> -> vector<2x128xf32>
    %463 = arith.addf %460, %462 : vector<2x128xf32>
    %464 = vector.extract_strided_slice %463 {offsets = [0, 0], sizes = [2, 32], strides = [1, 1]} : vector<2x128xf32> to vector<2x32xf32>
    %465 = arith.negf %464 : vector<2x32xf32>
    %466 = math.exp %465 : vector<2x32xf32>
    %cst_166 = arith.constant 1.000000e+00 : f32
    %467 = vector.broadcast %cst_166 : f32 to vector<2x32xf32>
    %468 = arith.addf %467, %466 : vector<2x32xf32>
    %469 = arith.divf %467, %468 : vector<2x32xf32>
    %470 = vector.extract_strided_slice %463 {offsets = [0, 32], sizes = [2, 32], strides = [1, 1]} : vector<2x128xf32> to vector<2x32xf32>
    %471 = arith.negf %470 : vector<2x32xf32>
    %472 = math.exp %471 : vector<2x32xf32>
    %cst_167 = arith.constant 1.000000e+00 : f32
    %473 = vector.broadcast %cst_167 : f32 to vector<2x32xf32>
    %474 = arith.addf %473, %472 : vector<2x32xf32>
    %475 = arith.divf %473, %474 : vector<2x32xf32>
    %476 = vector.extract_strided_slice %463 {offsets = [0, 64], sizes = [2, 32], strides = [1, 1]} : vector<2x128xf32> to vector<2x32xf32>
    %477 = math.tanh %476 : vector<2x32xf32>
    %478 = vector.extract_strided_slice %463 {offsets = [0, 96], sizes = [2, 32], strides = [1, 1]} : vector<2x128xf32> to vector<2x32xf32>
    %479 = arith.negf %478 : vector<2x32xf32>
    %480 = math.exp %479 : vector<2x32xf32>
    %cst_168 = arith.constant 1.000000e+00 : f32
    %481 = vector.broadcast %cst_168 : f32 to vector<2x32xf32>
    %482 = arith.addf %481, %480 : vector<2x32xf32>
    %483 = arith.divf %481, %482 : vector<2x32xf32>
    %484 = arith.mulf %475, %455 : vector<2x32xf32>
    %485 = arith.mulf %469, %477 : vector<2x32xf32>
    %486 = arith.addf %484, %485 : vector<2x32xf32>
    %487 = math.tanh %486 : vector<2x32xf32>
    %488 = arith.mulf %483, %487 : vector<2x32xf32>
    %c6_i32_169 = arith.constant 6 : i32
    %c2_i32_170 = arith.constant 2 : i32
    %489 = arith.muli %c6_i32_169, %c2_i32_170 : i32
    %490 = arith.index_cast %489 : i32 to index
    %c0_171 = arith.constant 0 : index
    %491 = vector.load %arg17[%490, %c0_171] : memref<16x128xf32, #tpu.memory_space<vmem>>, vector<2x128xf32>
    %c0_172 = arith.constant 0 : index
    %c0_173 = arith.constant 0 : index
    %492 = vector.load %arg8[%c0_172, %c0_173] : memref<32x128xf32, #tpu.memory_space<vmem>>, vector<32x128xf32>
    %cst_174 = arith.constant dense<0.000000e+00> : vector<2x128xf32>
    %493 = tpu.matmul %488, %492, %cst_174 {dimension_numbers = #tpu.dot_dimension_numbers<[1], [0], [0], [1], [0, 0, 1, 1], [], []>} : vector<2x32xf32>, vector<32x128xf32>, vector<2x128xf32> -> vector<2x128xf32>
    %494 = arith.addf %491, %493 : vector<2x128xf32>
    %495 = vector.extract_strided_slice %494 {offsets = [0, 0], sizes = [2, 32], strides = [1, 1]} : vector<2x128xf32> to vector<2x32xf32>
    %496 = arith.negf %495 : vector<2x32xf32>
    %497 = math.exp %496 : vector<2x32xf32>
    %cst_175 = arith.constant 1.000000e+00 : f32
    %498 = vector.broadcast %cst_175 : f32 to vector<2x32xf32>
    %499 = arith.addf %498, %497 : vector<2x32xf32>
    %500 = arith.divf %498, %499 : vector<2x32xf32>
    %501 = vector.extract_strided_slice %494 {offsets = [0, 32], sizes = [2, 32], strides = [1, 1]} : vector<2x128xf32> to vector<2x32xf32>
    %502 = arith.negf %501 : vector<2x32xf32>
    %503 = math.exp %502 : vector<2x32xf32>
    %cst_176 = arith.constant 1.000000e+00 : f32
    %504 = vector.broadcast %cst_176 : f32 to vector<2x32xf32>
    %505 = arith.addf %504, %503 : vector<2x32xf32>
    %506 = arith.divf %504, %505 : vector<2x32xf32>
    %507 = vector.extract_strided_slice %494 {offsets = [0, 64], sizes = [2, 32], strides = [1, 1]} : vector<2x128xf32> to vector<2x32xf32>
    %508 = math.tanh %507 : vector<2x32xf32>
    %509 = vector.extract_strided_slice %494 {offsets = [0, 96], sizes = [2, 32], strides = [1, 1]} : vector<2x128xf32> to vector<2x32xf32>
    %510 = arith.negf %509 : vector<2x32xf32>
    %511 = math.exp %510 : vector<2x32xf32>
    %cst_177 = arith.constant 1.000000e+00 : f32
    %512 = vector.broadcast %cst_177 : f32 to vector<2x32xf32>
    %513 = arith.addf %512, %511 : vector<2x32xf32>
    %514 = arith.divf %512, %513 : vector<2x32xf32>
    %515 = arith.mulf %506, %486 : vector<2x32xf32>
    %516 = arith.mulf %500, %508 : vector<2x32xf32>
    %517 = arith.addf %515, %516 : vector<2x32xf32>
    %518 = math.tanh %517 : vector<2x32xf32>
    %519 = arith.mulf %514, %518 : vector<2x32xf32>
    %c7_i32_178 = arith.constant 7 : i32
    %c2_i32_179 = arith.constant 2 : i32
    %520 = arith.muli %c7_i32_178, %c2_i32_179 : i32
    %521 = arith.index_cast %520 : i32 to index
    %c0_180 = arith.constant 0 : index
    %522 = vector.load %arg17[%521, %c0_180] : memref<16x128xf32, #tpu.memory_space<vmem>>, vector<2x128xf32>
    %c0_181 = arith.constant 0 : index
    %c0_182 = arith.constant 0 : index
    %523 = vector.load %arg8[%c0_181, %c0_182] : memref<32x128xf32, #tpu.memory_space<vmem>>, vector<32x128xf32>
    %cst_183 = arith.constant dense<0.000000e+00> : vector<2x128xf32>
    %524 = tpu.matmul %519, %523, %cst_183 {dimension_numbers = #tpu.dot_dimension_numbers<[1], [0], [0], [1], [0, 0, 1, 1], [], []>} : vector<2x32xf32>, vector<32x128xf32>, vector<2x128xf32> -> vector<2x128xf32>
    %525 = arith.addf %522, %524 : vector<2x128xf32>
    %526 = vector.extract_strided_slice %525 {offsets = [0, 0], sizes = [2, 32], strides = [1, 1]} : vector<2x128xf32> to vector<2x32xf32>
    %527 = arith.negf %526 : vector<2x32xf32>
    %528 = math.exp %527 : vector<2x32xf32>
    %cst_184 = arith.constant 1.000000e+00 : f32
    %529 = vector.broadcast %cst_184 : f32 to vector<2x32xf32>
    %530 = arith.addf %529, %528 : vector<2x32xf32>
    %531 = arith.divf %529, %530 : vector<2x32xf32>
    %532 = vector.extract_strided_slice %525 {offsets = [0, 32], sizes = [2, 32], strides = [1, 1]} : vector<2x128xf32> to vector<2x32xf32>
    %533 = arith.negf %532 : vector<2x32xf32>
    %534 = math.exp %533 : vector<2x32xf32>
    %cst_185 = arith.constant 1.000000e+00 : f32
    %535 = vector.broadcast %cst_185 : f32 to vector<2x32xf32>
    %536 = arith.addf %535, %534 : vector<2x32xf32>
    %537 = arith.divf %535, %536 : vector<2x32xf32>
    %538 = vector.extract_strided_slice %525 {offsets = [0, 64], sizes = [2, 32], strides = [1, 1]} : vector<2x128xf32> to vector<2x32xf32>
    %539 = math.tanh %538 : vector<2x32xf32>
    %540 = vector.extract_strided_slice %525 {offsets = [0, 96], sizes = [2, 32], strides = [1, 1]} : vector<2x128xf32> to vector<2x32xf32>
    %541 = arith.negf %540 : vector<2x32xf32>
    %542 = math.exp %541 : vector<2x32xf32>
    %cst_186 = arith.constant 1.000000e+00 : f32
    %543 = vector.broadcast %cst_186 : f32 to vector<2x32xf32>
    %544 = arith.addf %543, %542 : vector<2x32xf32>
    %545 = arith.divf %543, %544 : vector<2x32xf32>
    %546 = arith.mulf %537, %517 : vector<2x32xf32>
    %547 = arith.mulf %531, %539 : vector<2x32xf32>
    %548 = arith.addf %546, %547 : vector<2x32xf32>
    %549 = math.tanh %548 : vector<2x32xf32>
    %550 = arith.mulf %545, %549 : vector<2x32xf32>
    %c8_i32_187 = arith.constant 8 : i32
    %c1_188 = arith.constant 1 : index
    %c0_189 = arith.constant 0 : index
    %c0_190 = arith.constant 0 : index
    %551 = vector.load %arg15[%c1_188, %c0_189, %c0_190] : memref<2x2x32xf32, #tpu.memory_space<vmem>>, vector<1x2x32xf32>
    %552 = vector.shape_cast %551 : vector<1x2x32xf32> to vector<2x32xf32>
    %553 = vector.shape_cast %550 : vector<2x32xf32> to vector<1x2x32xf32>
    tpu.vector_store %arg15[%c1_188, %c0_189, %c0_190], %553 {strides = array<i32>} : memref<2x2x32xf32, #tpu.memory_space<vmem>>, vector<1x2x32xf32>,
    %c1_191 = arith.constant 1 : index
    %c0_192 = arith.constant 0 : index
    %c0_193 = arith.constant 0 : index
    %554 = vector.load %arg16[%c1_191, %c0_192, %c0_193] : memref<2x2x32xf32, #tpu.memory_space<vmem>>, vector<1x2x32xf32>
    %555 = vector.shape_cast %554 : vector<1x2x32xf32> to vector<2x32xf32>
    %556 = vector.shape_cast %548 : vector<2x32xf32> to vector<1x2x32xf32>
    tpu.vector_store %arg16[%c1_191, %c0_192, %c0_193], %556 {strides = array<i32>} : memref<2x2x32xf32, #tpu.memory_space<vmem>>, vector<1x2x32xf32>,
    %c0_i32_194 = arith.constant 0 : i32
    %557 = arith.cmpi eq, %arg0, %c0_i32_194 : i32
    %558 = arith.extui %557 : i1 to i32
    %c0_i32_195 = arith.constant 0 : i32
    %559 = arith.cmpi ne, %558, %c0_i32_195 : i32
    scf.if %559 {
      %c0_196 = arith.constant 0 : index
      %c0_197 = arith.constant 0 : index
      %c0_198 = arith.constant 0 : index
      %560 = vector.load %arg13[%c0_196, %c0_197, %c0_198] : memref<2x2x32xf32, #tpu.memory_space<vmem>>, vector<1x2x32xf32>
      %561 = vector.shape_cast %560 : vector<1x2x32xf32> to vector<2x32xf32>
      %562 = vector.shape_cast %282 : vector<2x32xf32> to vector<1x2x32xf32>
      tpu.vector_store %arg13[%c0_196, %c0_197, %c0_198], %562 {strides = array<i32>} : memref<2x2x32xf32, #tpu.memory_space<vmem>>, vector<1x2x32xf32>,
      %c0_199 = arith.constant 0 : index
      %c0_200 = arith.constant 0 : index
      %c0_201 = arith.constant 0 : index
      %563 = vector.load %arg14[%c0_199, %c0_200, %c0_201] : memref<2x2x32xf32, #tpu.memory_space<vmem>>, vector<1x2x32xf32>
      %564 = vector.shape_cast %563 : vector<1x2x32xf32> to vector<2x32xf32>
      %565 = vector.shape_cast %280 : vector<2x32xf32> to vector<1x2x32xf32>
      tpu.vector_store %arg14[%c0_199, %c0_200, %c0_201], %565 {strides = array<i32>} : memref<2x2x32xf32, #tpu.memory_space<vmem>>, vector<1x2x32xf32>,
      %c1_202 = arith.constant 1 : index
      %c0_203 = arith.constant 0 : index
      %c0_204 = arith.constant 0 : index
      %566 = vector.load %arg13[%c1_202, %c0_203, %c0_204] : memref<2x2x32xf32, #tpu.memory_space<vmem>>, vector<1x2x32xf32>
      %567 = vector.shape_cast %566 : vector<1x2x32xf32> to vector<2x32xf32>
      %568 = vector.shape_cast %550 : vector<2x32xf32> to vector<1x2x32xf32>
      tpu.vector_store %arg13[%c1_202, %c0_203, %c0_204], %568 {strides = array<i32>} : memref<2x2x32xf32, #tpu.memory_space<vmem>>, vector<1x2x32xf32>,
      %c1_205 = arith.constant 1 : index
      %c0_206 = arith.constant 0 : index
      %c0_207 = arith.constant 0 : index
      %569 = vector.load %arg14[%c1_205, %c0_206, %c0_207] : memref<2x2x32xf32, #tpu.memory_space<vmem>>, vector<1x2x32xf32>
      %570 = vector.shape_cast %569 : vector<1x2x32xf32> to vector<2x32xf32>
      %571 = vector.shape_cast %548 : vector<2x32xf32> to vector<1x2x32xf32>
      tpu.vector_store %arg14[%c1_205, %c0_206, %c0_207], %571 {strides = array<i32>} : memref<2x2x32xf32, #tpu.memory_space<vmem>>, vector<1x2x32xf32>,
      %c0_208 = arith.constant 0 : index
      %c0_209 = arith.constant 0 : index
      %572 = vector.load %arg10[%c0_208, %c0_209] : memref<32x4xf32, #tpu.memory_space<vmem>>, vector<32x4xf32>
      %cst_210 = arith.constant dense<0.000000e+00> : vector<2x4xf32>
      %573 = tpu.matmul %550, %572, %cst_210 {dimension_numbers = #tpu.dot_dimension_numbers<[1], [0], [0], [1], [0, 0, 1, 1], [], []>} : vector<2x32xf32>, vector<32x4xf32>, vector<2x4xf32> -> vector<2x4xf32>
      %c0_211 = arith.constant 0 : index
      %c0_212 = arith.constant 0 : index
      %574 = vector.load %arg11[%c0_211, %c0_212] : memref<1x4xf32, #tpu.memory_space<vmem>>, vector<1x4xf32>
      %575 = vector.broadcast %574 : vector<1x4xf32> to vector<2x4xf32>
      %576 = arith.addf %573, %575 : vector<2x4xf32>
      %c0_213 = arith.constant 0 : index
      %c0_214 = arith.constant 0 : index
      %577 = vector.load %arg12[%c0_213, %c0_214] : memref<2x4xf32, #tpu.memory_space<vmem>>, vector<2x4xf32>
      tpu.vector_store %arg12[%c0_213, %c0_214], %576 {strides = array<i32>} : memref<2x4xf32, #tpu.memory_space<vmem>>, vector<2x4xf32>,
    } else {
    }
    return
  }
  func.func @transform_0(%arg0: i32) -> (i32, i32) {
    %c0_i32 = arith.constant 0 : i32
    %c0_i32_0 = arith.constant 0 : i32
    return %arg0, %c0_i32 : i32, i32
  }
  func.func @transform_1(%arg0: i32) -> (i32, i32, i32) {
    %c0_i32 = arith.constant 0 : i32
    %c0_i32_0 = arith.constant 0 : i32
    %c0_i32_1 = arith.constant 0 : i32
    %c0_i32_2 = arith.constant 0 : i32
    return %c0_i32, %c0_i32_0, %c0_i32_1 : i32, i32, i32
  }
  func.func @transform_2(%arg0: i32) -> (i32, i32, i32) {
    %c0_i32 = arith.constant 0 : i32
    %c0_i32_0 = arith.constant 0 : i32
    %c0_i32_1 = arith.constant 0 : i32
    %c0_i32_2 = arith.constant 0 : i32
    return %c0_i32, %c0_i32_0, %c0_i32_1 : i32, i32, i32
  }
  func.func @transform_3(%arg0: i32) -> (i32, i32) {
    %c0_i32 = arith.constant 0 : i32
    %c0_i32_0 = arith.constant 0 : i32
    %c0_i32_1 = arith.constant 0 : i32
    return %c0_i32, %c0_i32_0 : i32, i32
  }
  func.func @transform_4(%arg0: i32) -> (i32, i32) {
    %c0_i32 = arith.constant 0 : i32
    %c0_i32_0 = arith.constant 0 : i32
    %c0_i32_1 = arith.constant 0 : i32
    return %c0_i32, %c0_i32_0 : i32, i32
  }
  func.func @transform_5(%arg0: i32) -> (i32, i32) {
    %c0_i32 = arith.constant 0 : i32
    %c0_i32_0 = arith.constant 0 : i32
    %c0_i32_1 = arith.constant 0 : i32
    return %c0_i32, %c0_i32_0 : i32, i32
  }
  func.func @transform_6(%arg0: i32) -> (i32, i32) {
    %c0_i32 = arith.constant 0 : i32
    %c0_i32_0 = arith.constant 0 : i32
    %c0_i32_1 = arith.constant 0 : i32
    return %c0_i32, %c0_i32_0 : i32, i32
  }
  func.func @transform_7(%arg0: i32) -> (i32, i32) {
    %c0_i32 = arith.constant 0 : i32
    %c0_i32_0 = arith.constant 0 : i32
    %c0_i32_1 = arith.constant 0 : i32
    return %c0_i32, %c0_i32_0 : i32, i32
  }
  func.func @transform_8(%arg0: i32) -> (i32, i32) {
    %c0_i32 = arith.constant 0 : i32
    %c0_i32_0 = arith.constant 0 : i32
    %c0_i32_1 = arith.constant 0 : i32
    return %c0_i32, %c0_i32_0 : i32, i32
  }
  func.func @transform_9(%arg0: i32) -> (i32, i32) {
    %c0_i32 = arith.constant 0 : i32
    %c0_i32_0 = arith.constant 0 : i32
    %c0_i32_1 = arith.constant 0 : i32
    return %c0_i32, %c0_i32_0 : i32, i32
  }
  func.func @transform_10(%arg0: i32) -> (i32, i32) {
    %c0_i32 = arith.constant 0 : i32
    %c0_i32_0 = arith.constant 0 : i32
    %c0_i32_1 = arith.constant 0 : i32
    return %c0_i32, %c0_i32_0 : i32, i32
  }
  func.func @transform_11(%arg0: i32) -> (i32, i32) {
    %c0_i32 = arith.constant 0 : i32
    %c0_i32_0 = arith.constant 0 : i32
    %c0_i32_1 = arith.constant 0 : i32
    return %c0_i32, %c0_i32_0 : i32, i32
  }
  func.func @transform_12(%arg0: i32) -> (i32, i32, i32) {
    %c0_i32 = arith.constant 0 : i32
    %c0_i32_0 = arith.constant 0 : i32
    %c0_i32_1 = arith.constant 0 : i32
    %c0_i32_2 = arith.constant 0 : i32
    return %c0_i32, %c0_i32_0, %c0_i32_1 : i32, i32, i32
  }
  func.func @transform_13(%arg0: i32) -> (i32, i32, i32) {
    %c0_i32 = arith.constant 0 : i32
    %c0_i32_0 = arith.constant 0 : i32
    %c0_i32_1 = arith.constant 0 : i32
    %c0_i32_2 = arith.constant 0 : i32
    return %c0_i32, %c0_i32_0, %c0_i32_1 : i32, i32, i32
  }
}

</mosaic_0001>

<llo_original>
// kernel: tpu_custom_call.1
$region0: #{tpu_custom_call.1}
  #allocation0 [shape = 'u32[]', space=smem, size = 0x4, offset = 0x4, fixed_abs, tag = 'smem constant byte address 0x4 - core index']
  #allocation1 [shape = 'u32[72,128]{1,0:T(1,128)}', space=vmem, size = 0x9000, scoped, tag = 'internal scratch']
  #allocation2 [shape = 'f32[2,2,32]{2,1,0:T(2,128)}', space=vmem, size = 0x800, scoped, tag = 'scratch operand']
  #allocation3 [shape = 'f32[2,2,32]{2,1,0:T(2,128)}', space=vmem, size = 0x800, scoped, tag = 'scratch operand']
  #allocation4 [shape = 'f32[16,128]{1,0:T(8,128)}', space=vmem, size = 0x2000, scoped, tag = 'scratch operand']
  #allocation5 [shape = 'f32[16,32]{1,0:T(8,128)}', space=vmem, size = 0x2000, scoped, tag = 'scratch operand']
  %s0 = inlined_call_operand.hbm [shape: f32[16,16], index: 0, kind: input, shape index: {}]
  %s1 = inlined_call_operand.vmem [shape: f32[2,2,32], index: 1, kind: input, shape index: {}]
  %s2 = inlined_call_operand.hbm [shape: f32[2,2,32], index: 2, kind: input, shape index: {}]
  %s3 = inlined_call_operand.hbm [shape: f32[16,128], index: 3, kind: input, shape index: {}]
  %s4 = inlined_call_operand.vmem [shape: f32[32,128], index: 4, kind: input, shape index: {}]
  %s5 = inlined_call_operand.vmem [shape: f32[1,128], index: 5, kind: input, shape index: {}]
  %s6 = inlined_call_operand.hbm [shape: f32[32,128], index: 6, kind: input, shape index: {}]
  %s7 = inlined_call_operand.hbm [shape: f32[32,128], index: 7, kind: input, shape index: {}]
  %s8 = inlined_call_operand.vmem [shape: f32[1,128], index: 8, kind: input, shape index: {}]
  %s9 = inlined_call_operand.vmem [shape: f32[32,4], index: 9, kind: input, shape index: {}]
  %s10 = inlined_call_operand.vmem [shape: f32[1,4], index: 10, kind: input, shape index: {}]
  %s11 = inlined_call_operand.hbm [shape: f32[2,4], index: 11, kind: output, shape index: {0}]
  %s12 = inlined_call_operand.hbm [shape: f32[2,2,32], index: 12, kind: output, shape index: {1}]
  %s13 = inlined_call_operand.hbm [shape: f32[2,2,32], index: 13, kind: output, shape index: {2}]
  %14 = xla_tuple %s11, %s12, %s13
  %s15 = sld [smem:[#allocation0]]
  $region98: #{tpu_custom_call.1} parent=0
    _
  %s17 = ssub.s32 1, %s15
  %s18 = scalar_select 0, %s17, %s15
  $region1: #{tpu_custom_call.1} parent=0
    #allocation6 [shape = 'u8[8192]{0}', space=vmem, size = 0x2000, scoped, tag = 'input window, operand 0, single buffered']
    #allocation7 [shape = 's32[1]{0}', space=sflag, size = 0x4, scoped, tag = 'scoped memory for tpu_custom_call.1']
    #allocation8 [shape = 's32[1]{0}', space=sflag, size = 0x4, scoped, tag = 'scoped memory for tpu_custom_call.1']
    #allocation9 [shape = 'u8[2048]{0}', space=vmem, size = 0x800, scoped, tag = 'input window, operand 2, single buffered']
    #allocation10 [shape = 's32[1]{0}', space=sflag, size = 0x4, scoped, tag = 'scoped memory for tpu_custom_call.1']
    #allocation11 [shape = 'u8[8192]{0}', space=vmem, size = 0x2000, scoped, tag = 'input window, operand 3, single buffered']
    #allocation12 [shape = 'u8[16384]{0}', space=vmem, size = 0x4000, scoped, tag = 'input window, operand 6, single buffered']
    #allocation13 [shape = 's32[1]{0}', space=sflag, size = 0x4, scoped, tag = 'scoped memory for tpu_custom_call.1']
    #allocation14 [shape = 'u8[16384]{0}', space=vmem, size = 0x4000, scoped, tag = 'input window, operand 7, single buffered']
    #allocation15 [shape = 'u8[1024]{0}', space=vmem, size = 0x400, scoped, tag = 'output window, operand 0, single buffered']
    #allocation16 [shape = 'u8[2048]{0}', space=vmem, size = 0x800, scoped, tag = 'output window, operand 1, single buffered']
    #allocation17 [shape = 's32[1]{0}', space=sflag, size = 0x4, scoped, tag = 'scoped memory for tpu_custom_call.1']
    #allocation18 [shape = 'u8[2048]{0}', space=vmem, size = 0x800, scoped, tag = 'output window, operand 2, single buffered']
    %19 = vsyncpa [#allocation7], 0
    %20 = vsyncpa [#allocation10], 0
    %21 = vsyncpa [#allocation13], 0
    %22 = vsyncpa [#allocation8], 0
    %23 = vsyncpa [#allocation17], 0
    // Predicated region
    $region2: #{tpu_custom_call.1} parent=1 // pred_check
      _
    $region3: #{tpu_custom_call.1} parent=1 // pred_check_branch
      %25 = sbr.rel (0) target = $region5
    $region4: #{tpu_custom_call.1} parent=1 // pred_region
      %27 = vsyncadd [#allocation7], 0
      %s28 = sshll.u32 %s0, 4
      %s29 = int_to_ptr.hbm [resolvable:$true] %s28
      %s30 = sshll.u32 [#allocation6], 4
      %s31 = int_to_ptr.vmem [resolvable:$true] %s30
      %36 = dma.hbm_to_vmem [thread:$0]  %s29, 256, %s31, [#allocation7], 128, 128, 8
    $region5: #{tpu_custom_call.1} parent=1 // pred_fallthru
      _
    // Predicated region
    $region6: #{tpu_custom_call.1} parent=1 // pred_check
      _
    $region7: #{tpu_custom_call.1} parent=1 // pred_check_branch
      %38 = sbr.rel (0) target = $region9
    $region8: #{tpu_custom_call.1} parent=1 // pred_region
      _
    $region9: #{tpu_custom_call.1} parent=1 // pred_fallthru
      _
    // Predicated region
    $region10: #{tpu_custom_call.1} parent=1 // pred_check
      _
    $region11: #{tpu_custom_call.1} parent=1 // pred_check_branch
      %40 = sbr.rel (0) target = $region13
    $region12: #{tpu_custom_call.1} parent=1 // pred_region
      %42 = vsyncadd [#allocation10], 0
      %s43 = sshll.u32 %s2, 4
      %s44 = int_to_ptr.hbm [resolvable:$true] %s43
      %s45 = sshll.u32 [#allocation9], 4
      %s46 = int_to_ptr.vmem [resolvable:$true] %s45
      %51 = dma.hbm_to_vmem [thread:$0]  %s44, 64, %s46, [#allocation10], 32, 32, 2
    $region13: #{tpu_custom_call.1} parent=1 // pred_fallthru
      _
    // Predicated region
    $region14: #{tpu_custom_call.1} parent=1 // pred_check
      _
    $region15: #{tpu_custom_call.1} parent=1 // pred_check_branch
      %53 = sbr.rel (0) target = $region17
    $region16: #{tpu_custom_call.1} parent=1 // pred_region
      %55 = vsyncadd [#allocation10], 0
      %s56 = sshll.u32 %s3, 4
      %s57 = int_to_ptr.hbm [resolvable:$true] %s56
      %s58 = sshll.u32 [#allocation11], 4
      %s59 = int_to_ptr.vmem [resolvable:$true] %s58
      %64 = dma.hbm_to_vmem [thread:$0]  %s57, 256, %s59, [#allocation10], 128, 128, 8
    $region17: #{tpu_custom_call.1} parent=1 // pred_fallthru
      _
    // Predicated region
    $region18: #{tpu_custom_call.1} parent=1 // pred_check
      _
    $region19: #{tpu_custom_call.1} parent=1 // pred_check_branch
      %66 = sbr.rel (0) target = $region21
    $region20: #{tpu_custom_call.1} parent=1 // pred_region
      _
    $region21: #{tpu_custom_call.1} parent=1 // pred_fallthru
      _
    // Predicated region
    $region22: #{tpu_custom_call.1} parent=1 // pred_check
      _
    $region23: #{tpu_custom_call.1} parent=1 // pred_check_branch
      %68 = sbr.rel (0) target = $region25
    $region24: #{tpu_custom_call.1} parent=1 // pred_region
      _
    $region25: #{tpu_custom_call.1} parent=1 // pred_fallthru
      _
    // Predicated region
    $region26: #{tpu_custom_call.1} parent=1 // pred_check
      _
    $region27: #{tpu_custom_call.1} parent=1 // pred_check_branch
      %70 = sbr.rel (0) target = $region29
    $region28: #{tpu_custom_call.1} parent=1 // pred_region
      %72 = vsyncadd [#allocation13], 0
      %s73 = sshll.u32 %s6, 4
      %s74 = int_to_ptr.hbm [resolvable:$true] %s73
      %s75 = sshll.u32 [#allocation12], 4
      %s76 = int_to_ptr.vmem [resolvable:$true] %s75
      %81 = dma.hbm_to_vmem [thread:$0]  %s74, 512, %s76, [#allocation13], 128, 128, 8
    $region29: #{tpu_custom_call.1} parent=1 // pred_fallthru
      _
    // Predicated region
    $region30: #{tpu_custom_call.1} parent=1 // pred_check
      _
    $region31: #{tpu_custom_call.1} parent=1 // pred_check_branch
      %83 = sbr.rel (0) target = $region33
    $region32: #{tpu_custom_call.1} parent=1 // pred_region
      %85 = vsyncadd [#allocation13], 0
      %s86 = sshll.u32 %s7, 4
      %s87 = int_to_ptr.hbm [resolvable:$true] %s86
      %s88 = sshll.u32 [#allocation14], 4
      %s89 = int_to_ptr.vmem [resolvable:$true] %s88
      %94 = dma.hbm_to_vmem [thread:$0]  %s87, 512, %s89, [#allocation13], 128, 128, 8
    $region33: #{tpu_custom_call.1} parent=1 // pred_fallthru
      _
    // Predicated region
    $region34: #{tpu_custom_call.1} parent=1 // pred_check
      _
    $region35: #{tpu_custom_call.1} parent=1 // pred_check_branch
      %96 = sbr.rel (0) target = $region37
    $region36: #{tpu_custom_call.1} parent=1 // pred_region
      _
    $region37: #{tpu_custom_call.1} parent=1 // pred_fallthru
      _
    // Predicated region
    $region38: #{tpu_custom_call.1} parent=1 // pred_check
      _
    $region39: #{tpu_custom_call.1} parent=1 // pred_check_branch
      %98 = sbr.rel (0) target = $region41
    $region40: #{tpu_custom_call.1} parent=1 // pred_region
      _
    $region41: #{tpu_custom_call.1} parent=1 // pred_fallthru
      _
    // Predicated region
    $region42: #{tpu_custom_call.1} parent=1 // pred_check
      _
    $region43: #{tpu_custom_call.1} parent=1 // pred_check_branch
      %100 = sbr.rel (0) target = $region45
    $region44: #{tpu_custom_call.1} parent=1 // pred_region
      _
    $region45: #{tpu_custom_call.1} parent=1 // pred_fallthru
      _
    // Predicated region
    $region46: #{tpu_custom_call.1} parent=1 // pred_check
      _
    $region47: #{tpu_custom_call.1} parent=1 // pred_check_branch
      %102 = sbr.rel (0) target = $region49
    $region48: #{tpu_custom_call.1} parent=1 // pred_region
      %104 = dma.done [#allocation7], 256
    $region49: #{tpu_custom_call.1} parent=1 // pred_fallthru
      _
    // Predicated region
    $region50: #{tpu_custom_call.1} parent=1 // pred_check
      _
    $region51: #{tpu_custom_call.1} parent=1 // pred_check_branch
      %106 = sbr.rel (0) target = $region53
    $region52: #{tpu_custom_call.1} parent=1 // pred_region
      %108 = dma.done [#allocation10], 64
    $region53: #{tpu_custom_call.1} parent=1 // pred_fallthru
      _
    // Predicated region
    $region54: #{tpu_custom_call.1} parent=1 // pred_check
      _
    $region55: #{tpu_custom_call.1} parent=1 // pred_check_branch
      %110 = sbr.rel (0) target = $region57
    $region56: #{tpu_custom_call.1} parent=1 // pred_region
      %112 = dma.done [#allocation10], 256
    $region57: #{tpu_custom_call.1} parent=1 // pred_fallthru
      _
    // Predicated region
    $region58: #{tpu_custom_call.1} parent=1 // pred_check
      _
    $region59: #{tpu_custom_call.1} parent=1 // pred_check_branch
      %114 = sbr.rel (0) target = $region61
    $region60: #{tpu_custom_call.1} parent=1 // pred_region
      %116 = dma.done [#allocation13], 512
    $region61: #{tpu_custom_call.1} parent=1 // pred_fallthru
      _
    // Predicated region
    $region62: #{tpu_custom_call.1} parent=1 // pred_check
      _
    $region63: #{tpu_custom_call.1} parent=1 // pred_check_branch
      %118 = sbr.rel (0) target = $region65
    $region64: #{tpu_custom_call.1} parent=1 // pred_region
      %120 = dma.done [#allocation13], 512
    $region65: #{tpu_custom_call.1} parent=1 // pred_fallthru
      _
    %p121 = scmp.eq.s32.totalorder 0, 0
    // Predicated region
    $region66: #{tpu_custom_call.1} parent=1 // pred_check
      %p122 = pneg %p121
    $region67: #{tpu_custom_call.1} parent=1 // pred_check_branch
      %124 = sbr.rel (%p122) target = $region69
    $region68: #{tpu_custom_call.1} parent=1 // pred_region
      %v125 = vld [vmem:[%s1] sm:$0x3]
      %v126 = vld [vmem:[%s1 + $0x2] sm:$0x3]
      %vm127 = vcmask 254976
      %128 = vst.msk [vmem:[#allocation2] sm:$0x3] %vm127, %v125
      %129 = vst.msk [vmem:[#allocation2 + $0x2] sm:$0x3] %vm127, %v126
      %v130 = vld [vmem:[#allocation9] sm:$0x3]
      %v131 = vld [vmem:[#allocation9 + $0x2] sm:$0x3]
      %132 = vst.msk [vmem:[#allocation3] sm:$0x3] %vm127, %v130
      %133 = vst.msk [vmem:[#allocation3 + $0x2] sm:$0x3] %vm127, %v131
    $region69: #{tpu_custom_call.1} parent=1 // pred_fallthru
      _
    %v134 = vld [vmem:[#allocation6] sm:$0xff]
    %v135 = vld [vmem:[#allocation6 + $0x8] sm:$0xff]
    %v136 = vld [vmem:[#allocation11] sm:$0xff]
    %v137 = vld [vmem:[#allocation11 + $0x8] sm:$0xff]
    %v138 = vld [vmem:[%s5] sm:$0x1]
    %v140 = vperm.slane %v138, 0
    %vm142 = vcmask 130048
    %v144 = vsel %vm142, %v134, 0
    %v147 = vsel %vm142, %v135, 0
    %149 = vmatpush.msra.mxu0 0.0
    %150 = vmatpush.msra.mxu0 0.0
    %151 = vmatpush.msra.mxu0 0.0
    %152 = vmatpush.msra.mxu0 0.0
    %153 = vmatpush.msra.mxu0 0.0
    %154 = vmatpush.msra.mxu0 0.0
    %155 = vmatpush.msra.mxu0 0.0
    %156 = vmatpush.msra.mxu0 0.0
    %157 = vmatpush.msra.mxu0 0.0
    %158 = vmatpush.msra.mxu0 0.0
    %159 = vmatpush.msra.mxu0 0.0
    %160 = vmatpush.msra.mxu0 0.0
    %161 = vmatpush.msra.mxu0 0.0
    %162 = vmatpush.msra.mxu0 0.0
    %163 = vmatpush.msra.mxu0 %v137
    %164 = vmatpush.msra.mxu0 %v136
    %165 = vmatmul.f32.gmra.mxu0 %v144
    %v166 = vpop.f32.mrf.mxu0
    %v167 = vadd.f32 %v140, %v166
    %168 = vmatmul.f32.gmra.mxu0 %v147
    %v169 = vpop.f32.mrf.mxu0
    %v170 = vadd.f32 %v140, %v169
    %171 = vdwg.mxu0
    %172 = vst [vmem:[#allocation4] sm:$0xff] %v167
    %173 = vst [vmem:[#allocation4 + $0x8] sm:$0xff] %v170
    %v174 = vld [vmem:[#allocation2] sm:$0x3]
    %v175 = vld [vmem:[#allocation3] sm:$0x3]
    %v176 = vld [vmem:[#allocation4] sm:$0x3]
    %v177 = vld [vmem:[%s4] sm:$0xff]
    %v178 = vld [vmem:[%s4 + $0x8] sm:$0xff]
    %v179 = vld [vmem:[%s4 + $0x10] sm:$0xff]
    %v180 = vld [vmem:[%s4 + $0x18] sm:$0xff]
    %vm181 = vcmask 261120
    %v183 = vsel %vm181, %v174, 0
    %185 = vmatpush.msra.mxu0 0.0
    %186 = vmatpush.msra.mxu0 0.0
    %187 = vmatpush.msra.mxu0 0.0
    %188 = vmatpush.msra.mxu0 0.0
    %189 = vmatpush.msra.mxu0 0.0
    %190 = vmatpush.msra.mxu0 0.0
    %191 = vmatpush.msra.mxu0 0.0
    %192 = vmatpush.msra.mxu0 0.0
    %193 = vmatpush.msra.mxu0 0.0
    %194 = vmatpush.msra.mxu0 0.0
    %195 = vmatpush.msra.mxu0 0.0
    %196 = vmatpush.msra.mxu0 0.0
    %197 = vmatpush.msra.mxu0 %v180
    %198 = vmatpush.msra.mxu0 %v179
    %199 = vmatpush.msra.mxu0 %v178
    %200 = vmatpush.msra.mxu0 %v177
    %201 = vmatmul.f32.gmra.mxu0 %v183
    %v202 = vpop.f32.mrf.mxu0
    %v203 = vadd.f32 0.0, %v202
    %204 = vdwg.mxu0
    %v205 = vadd.f32 %v176, %v203
    %v206 = vxor.u32 %v205, 2147483648
    %v207 = vmul.f32 %v206, 1.442695
    %v208 = vpow.pop %v207
    %v209 = vadd.f32 %v208, 1.0
    %v210 = vrcp.pop %v209
    %v211 = vmul.f32 %v209, %v210
    %v212 = vsub.f32 1.0, %v211
    %v213 = vmul.f32 %v210, %v212
    %v214 = vadd.f32 %v210, %v213
    %vm215 = vweird.f32 %v209
    %vm216 = vweird.f32 %v210
    %vm217 = vmor %vm215, %vm216
    %v218 = vsel %vm217, %v210, %v214
    %v219 = vand.u32 2147483647, %v209
    %vm220 = vcmp.eq.f32.partialorder %v219, 8.507059e+37
    %v221 = vand.u32 %v209, 2147483648
    %v222 = vor.u32 1.1754944e-38, %v221
    %v223 = vsel %vm220, %v222, %v218
    %v224 = vmul.f32 1.0, %v223
    %v225 = vtanh.pop %v205
    %227 = vrot.lane.b32.xlu0 %v175, 32
    %v228 = vpop.permute.xlu0 %227
    %v230 = vmul.f32 %v224, %v228
    %232 = vrot.lane.b32.xlu0 %v225, 64
    %v233 = vpop.permute.xlu0 %232
    %v235 = vmul.f32 %v224, %v233
    %237 = vrot.lane.b32.xlu0 %v235, 32
    %v238 = vpop.permute.xlu0 %237
    %v240 = vadd.f32 %v230, %v238
    %v241 = vtanh.pop %v240
    %243 = vrot.lane.b32.xlu0 %v241, 64
    %v244 = vpop.permute.xlu0 %243
    %v246 = vmul.f32 %v224, %v244
    %248 = vrot.lane.b32.xlu0 %v246, 32
    %v249 = vpop.permute.xlu0 %248
    %vm251 = vcmask 254976
    %252 = vst.msk [vmem:[#allocation5] sm:$0x3] %vm251, %v249
    %v253 = vld [vmem:[#allocation4 + $0x2] sm:$0x3]
    %v254 = vld [vmem:[%s4] sm:$0xff]
    %v255 = vld [vmem:[%s4 + $0x8] sm:$0xff]
    %v256 = vld [vmem:[%s4 + $0x10] sm:$0xff]
    %v257 = vld [vmem:[%s4 + $0x18] sm:$0xff]
    %v258 = vsel %vm181, %v249, 0
    %260 = vmatpush.msra.mxu0 0.0
    %261 = vmatpush.msra.mxu0 0.0
    %262 = vmatpush.msra.mxu0 0.0
    %263 = vmatpush.msra.mxu0 0.0
    %264 = vmatpush.msra.mxu0 0.0
    %265 = vmatpush.msra.mxu0 0.0
    %266 = vmatpush.msra.mxu0 0.0
    %267 = vmatpush.msra.mxu0 0.0
    %268 = vmatpush.msra.mxu0 0.0
    %269 = vmatpush.msra.mxu0 0.0
    %270 = vmatpush.msra.mxu0 0.0
    %271 = vmatpush.msra.mxu0 0.0
    %272 = vmatpush.msra.mxu0 %v257
    %273 = vmatpush.msra.mxu0 %v256
    %274 = vmatpush.msra.mxu0 %v255
    %275 = vmatpush.msra.mxu0 %v254
    %276 = vmatmul.f32.gmra.mxu0 %v258
    %v277 = vpop.f32.mrf.mxu0
    %v278 = vadd.f32 0.0, %v277
    %279 = vdwg.mxu0
    %v280 = vadd.f32 %v253, %v278
    %v281 = vxor.u32 %v280, 2147483648
    %v282 = vmul.f32 %v281, 1.442695
    %v283 = vpow.pop %v282
    %v284 = vadd.f32 %v283, 1.0
    %v285 = vrcp.pop %v284
    %v286 = vmul.f32 %v284, %v285
    %v287 = vsub.f32 1.0, %v286
    %v288 = vmul.f32 %v285, %v287
    %v289 = vadd.f32 %v285, %v288
    %vm290 = vweird.f32 %v284
    %vm291 = vweird.f32 %v285
    %vm292 = vmor %vm290, %vm291
    %v293 = vsel %vm292, %v285, %v289
    %v294 = vand.u32 2147483647, %v284
    %vm295 = vcmp.eq.f32.partialorder %v294, 8.507059e+37
    %v296 = vand.u32 %v284, 2147483648
    %v297 = vor.u32 1.1754944e-38, %v296
    %v298 = vsel %vm295, %v297, %v293
    %v299 = vmul.f32 1.0, %v298
    %v300 = vtanh.pop %v280
    %v301 = vmul.f32 %v299, %v240
    %303 = vrot.lane.b32.xlu0 %v300, 64
    %v304 = vpop.permute.xlu0 %303
    %v306 = vmul.f32 %v299, %v304
    %308 = vrot.lane.b32.xlu0 %v306, 32
    %v309 = vpop.permute.xlu0 %308
    %v311 = vadd.f32 %v301, %v309
    %v312 = vtanh.pop %v311
    %314 = vrot.lane.b32.xlu0 %v312, 64
    %v315 = vpop.permute.xlu0 %314
    %v317 = vmul.f32 %v299, %v315
    %319 = vrot.lane.b32.xlu0 %v317, 32
    %v320 = vpop.permute.xlu0 %319
    %322 = vst.msk [vmem:[#allocation5 + $0x2] sm:$0x3] %vm251, %v320
    %v323 = vld [vmem:[#allocation4 + $0x4] sm:$0x3]
    %v324 = vld [vmem:[%s4] sm:$0xff]
    %v325 = vld [vmem:[%s4 + $0x8] sm:$0xff]
    %v326 = vld [vmem:[%s4 + $0x10] sm:$0xff]
    %v327 = vld [vmem:[%s4 + $0x18] sm:$0xff]
    %v328 = vsel %vm181, %v320, 0
    %330 = vmatpush.msra.mxu0 0.0
    %331 = vmatpush.msra.mxu0 0.0
    %332 = vmatpush.msra.mxu0 0.0
    %333 = vmatpush.msra.mxu0 0.0
    %334 = vmatpush.msra.mxu0 0.0
    %335 = vmatpush.msra.mxu0 0.0
    %336 = vmatpush.msra.mxu0 0.0
    %337 = vmatpush.msra.mxu0 0.0
    %338 = vmatpush.msra.mxu0 0.0
    %339 = vmatpush.msra.mxu0 0.0
    %340 = vmatpush.msra.mxu0 0.0
    %341 = vmatpush.msra.mxu0 0.0
    %342 = vmatpush.msra.mxu0 %v327
    %343 = vmatpush.msra.mxu0 %v326
    %344 = vmatpush.msra.mxu0 %v325
    %345 = vmatpush.msra.mxu0 %v324
    %346 = vmatmul.f32.gmra.mxu0 %v328
    %v347 = vpop.f32.mrf.mxu0
    %v348 = vadd.f32 0.0, %v347
    %349 = vdwg.mxu0
    %v350 = vadd.f32 %v323, %v348
    %v351 = vxor.u32 %v350, 2147483648
    %v352 = vmul.f32 %v351, 1.442695
    %v353 = vpow.pop %v352
    %v354 = vadd.f32 %v353, 1.0
    %v355 = vrcp.pop %v354
    %v356 = vmul.f32 %v354, %v355
    %v357 = vsub.f32 1.0, %v356
    %v358 = vmul.f32 %v355, %v357
    %v359 = vadd.f32 %v355, %v358
    %vm360 = vweird.f32 %v354
    %vm361 = vweird.f32 %v355
    %vm362 = vmor %vm360, %vm361
    %v363 = vsel %vm362, %v355, %v359
    %v364 = vand.u32 2147483647, %v354
    %vm365 = vcmp.eq.f32.partialorder %v364, 8.507059e+37
    %v366 = vand.u32 %v354, 2147483648
    %v367 = vor.u32 1.1754944e-38, %v366
    %v368 = vsel %vm365, %v367, %v363
    %v369 = vmul.f32 1.0, %v368
    %v370 = vtanh.pop %v350
    %v371 = vmul.f32 %v369, %v311
    %373 = vrot.lane.b32.xlu0 %v370, 64
    %v374 = vpop.permute.xlu0 %373
    %v376 = vmul.f32 %v369, %v374
    %378 = vrot.lane.b32.xlu0 %v376, 32
    %v379 = vpop.permute.xlu0 %378
    %v381 = vadd.f32 %v371, %v379
    %v382 = vtanh.pop %v381
    %384 = vrot.lane.b32.xlu0 %v382, 64
    %v385 = vpop.permute.xlu0 %384
    %v387 = vmul.f32 %v369, %v385
    %389 = vrot.lane.b32.xlu0 %v387, 32
    %v390 = vpop.permute.xlu0 %389
    %392 = vst.msk [vmem:[#allocation5 + $0x4] sm:$0x3] %vm251, %v390
    %v393 = vld [vmem:[#allocation4 + $0x6] sm:$0x3]
    %v394 = vld [vmem:[%s4] sm:$0xff]
    %v395 = vld [vmem:[%s4 + $0x8] sm:$0xff]
    %v396 = vld [vmem:[%s4 + $0x10] sm:$0xff]
    %v397 = vld [vmem:[%s4 + $0x18] sm:$0xff]
    %v398 = vsel %vm181, %v390, 0
    %400 = vmatpush.msra.mxu0 0.0
    %401 = vmatpush.msra.mxu0 0.0
    %402 = vmatpush.msra.mxu0 0.0
    %403 = vmatpush.msra.mxu0 0.0
    %404 = vmatpush.msra.mxu0 0.0
    %405 = vmatpush.msra.mxu0 0.0
    %406 = vmatpush.msra.mxu0 0.0
    %407 = vmatpush.msra.mxu0 0.0
    %408 = vmatpush.msra.mxu0 0.0
    %409 = vmatpush.msra.mxu0 0.0
    %410 = vmatpush.msra.mxu0 0.0
    %411 = vmatpush.msra.mxu0 0.0
    %412 = vmatpush.msra.mxu0 %v397
    %413 = vmatpush.msra.mxu0 %v396
    %414 = vmatpush.msra.mxu0 %v395
    %415 = vmatpush.msra.mxu0 %v394
    %416 = vmatmul.f32.gmra.mxu0 %v398
    %v417 = vpop.f32.mrf.mxu0
    %v418 = vadd.f32 0.0, %v417
    %419 = vdwg.mxu0
    %v420 = vadd.f32 %v393, %v418
    %v421 = vxor.u32 %v420, 2147483648
    %v422 = vmul.f32 %v421, 1.442695
    %v423 = vpow.pop %v422
    %v424 = vadd.f32 %v423, 1.0
    %v425 = vrcp.pop %v424
    %v426 = vmul.f32 %v424, %v425
    %v427 = vsub.f32 1.0, %v426
    %v428 = vmul.f32 %v425, %v427
    %v429 = vadd.f32 %v425, %v428
    %vm430 = vweird.f32 %v424
    %vm431 = vweird.f32 %v425
    %vm432 = vmor %vm430, %vm431
    %v433 = vsel %vm432, %v425, %v429
    %v434 = vand.u32 2147483647, %v424
    %vm435 = vcmp.eq.f32.partialorder %v434, 8.507059e+37
    %v436 = vand.u32 %v424, 2147483648
    %v437 = vor.u32 1.1754944e-38, %v436
    %v438 = vsel %vm435, %v437, %v433
    %v439 = vmul.f32 1.0, %v438
    %v440 = vtanh.pop %v420
    %v441 = vmul.f32 %v439, %v381
    %443 = vrot.lane.b32.xlu0 %v440, 64
    %v444 = vpop.permute.xlu0 %443
    %v446 = vmul.f32 %v439, %v444
    %448 = vrot.lane.b32.xlu0 %v446, 32
    %v449 = vpop.permute.xlu0 %448
    %v451 = vadd.f32 %v441, %v449
    %v452 = vtanh.pop %v451
    %454 = vrot.lane.b32.xlu0 %v452, 64
    %v455 = vpop.permute.xlu0 %454
    %v457 = vmul.f32 %v439, %v455
    %459 = vrot.lane.b32.xlu0 %v457, 32
    %v460 = vpop.permute.xlu0 %459
    %462 = vst.msk [vmem:[#allocation5 + $0x6] sm:$0x3] %vm251, %v460
    %v463 = vld [vmem:[#allocation4 + $0x8] sm:$0x3]
    %v464 = vld [vmem:[%s4] sm:$0xff]
    %v465 = vld [vmem:[%s4 + $0x8] sm:$0xff]
    %v466 = vld [vmem:[%s4 + $0x10] sm:$0xff]
    %v467 = vld [vmem:[%s4 + $0x18] sm:$0xff]
    %v468 = vsel %vm181, %v460, 0
    %470 = vmatpush.msra.mxu0 0.0
    %471 = vmatpush.msra.mxu0 0.0
    %472 = vmatpush.msra.mxu0 0.0
    %473 = vmatpush.msra.mxu0 0.0
    %474 = vmatpush.msra.mxu0 0.0
    %475 = vmatpush.msra.mxu0 0.0
    %476 = vmatpush.msra.mxu0 0.0
    %477 = vmatpush.msra.mxu0 0.0
    %478 = vmatpush.msra.mxu0 0.0
    %479 = vmatpush.msra.mxu0 0.0
    %480 = vmatpush.msra.mxu0 0.0
    %481 = vmatpush.msra.mxu0 0.0
    %482 = vmatpush.msra.mxu0 %v467
    %483 = vmatpush.msra.mxu0 %v466
    %484 = vmatpush.msra.mxu0 %v465
    %485 = vmatpush.msra.mxu0 %v464
    %486 = vmatmul.f32.gmra.mxu0 %v468
    %v487 = vpop.f32.mrf.mxu0
    %v488 = vadd.f32 0.0, %v487
    %489 = vdwg.mxu0
    %v490 = vadd.f32 %v463, %v488
    %v491 = vxor.u32 %v490, 2147483648
    %v492 = vmul.f32 %v491, 1.442695
    %v493 = vpow.pop %v492
    %v494 = vadd.f32 %v493, 1.0
    %v495 = vrcp.pop %v494
    %v496 = vmul.f32 %v494, %v495
    %v497 = vsub.f32 1.0, %v496
    %v498 = vmul.f32 %v495, %v497
    %v499 = vadd.f32 %v495, %v498
    %vm500 = vweird.f32 %v494
    %vm501 = vweird.f32 %v495
    %vm502 = vmor %vm500, %vm501
    %v503 = vsel %vm502, %v495, %v499
    %v504 = vand.u32 2147483647, %v494
    %vm505 = vcmp.eq.f32.partialorder %v504, 8.507059e+37
    %v506 = vand.u32 %v494, 2147483648
    %v507 = vor.u32 1.1754944e-38, %v506
    %v508 = vsel %vm505, %v507, %v503
    %v509 = vmul.f32 1.0, %v508
    %v510 = vtanh.pop %v490
    %v511 = vmul.f32 %v509, %v451
    %513 = vrot.lane.b32.xlu0 %v510, 64
    %v514 = vpop.permute.xlu0 %513
    %v516 = vmul.f32 %v509, %v514
    %518 = vrot.lane.b32.xlu0 %v516, 32
    %v519 = vpop.permute.xlu0 %518
    %v521 = vadd.f32 %v511, %v519
    %v522 = vtanh.pop %v521
    %524 = vrot.lane.b32.xlu0 %v522, 64
    %v525 = vpop.permute.xlu0 %524
    %v527 = vmul.f32 %v509, %v525
    %529 = vrot.lane.b32.xlu0 %v527, 32
    %v530 = vpop.permute.xlu0 %529
    %532 = vst.msk [vmem:[#allocation5 + $0x8] sm:$0x3] %vm251, %v530
    %v533 = vld [vmem:[#allocation4 + $0xa] sm:$0x3]
    %v534 = vld [vmem:[%s4] sm:$0xff]
    %v535 = vld [vmem:[%s4 + $0x8] sm:$0xff]
    %v536 = vld [vmem:[%s4 + $0x10] sm:$0xff]
    %v537 = vld [vmem:[%s4 + $0x18] sm:$0xff]
    %v538 = vsel %vm181, %v530, 0
    %540 = vmatpush.msra.mxu0 0.0
    %541 = vmatpush.msra.mxu0 0.0
    %542 = vmatpush.msra.mxu0 0.0
    %543 = vmatpush.msra.mxu0 0.0
    %544 = vmatpush.msra.mxu0 0.0
    %545 = vmatpush.msra.mxu0 0.0
    %546 = vmatpush.msra.mxu0 0.0
    %547 = vmatpush.msra.mxu0 0.0
    %548 = vmatpush.msra.mxu0 0.0
    %549 = vmatpush.msra.mxu0 0.0
    %550 = vmatpush.msra.mxu0 0.0
    %551 = vmatpush.msra.mxu0 0.0
    %552 = vmatpush.msra.mxu0 %v537
    %553 = vmatpush.msra.mxu0 %v536
    %554 = vmatpush.msra.mxu0 %v535
    %555 = vmatpush.msra.mxu0 %v534
    %556 = vmatmul.f32.gmra.mxu0 %v538
    %v557 = vpop.f32.mrf.mxu0
    %v558 = vadd.f32 0.0, %v557
    %559 = vdwg.mxu0
    %v560 = vadd.f32 %v533, %v558
    %v561 = vxor.u32 %v560, 2147483648
    %v562 = vmul.f32 %v561, 1.442695
    %v563 = vpow.pop %v562
    %v564 = vadd.f32 %v563, 1.0
    %v565 = vrcp.pop %v564
    %v566 = vmul.f32 %v564, %v565
    %v567 = vsub.f32 1.0, %v566
    %v568 = vmul.f32 %v565, %v567
    %v569 = vadd.f32 %v565, %v568
    %vm570 = vweird.f32 %v564
    %vm571 = vweird.f32 %v565
    %vm572 = vmor %vm570, %vm571
    %v573 = vsel %vm572, %v565, %v569
    %v574 = vand.u32 2147483647, %v564
    %vm575 = vcmp.eq.f32.partialorder %v574, 8.507059e+37
    %v576 = vand.u32 %v564, 2147483648
    %v577 = vor.u32 1.1754944e-38, %v576
    %v578 = vsel %vm575, %v577, %v573
    %v579 = vmul.f32 1.0, %v578
    %v580 = vtanh.pop %v560
    %v581 = vmul.f32 %v579, %v521
    %583 = vrot.lane.b32.xlu0 %v580, 64
    %v584 = vpop.permute.xlu0 %583
    %v586 = vmul.f32 %v579, %v584
    %588 = vrot.lane.b32.xlu0 %v586, 32
    %v589 = vpop.permute.xlu0 %588
    %v591 = vadd.f32 %v581, %v589
    %v592 = vtanh.pop %v591
    %594 = vrot.lane.b32.xlu0 %v592, 64
    %v595 = vpop.permute.xlu0 %594
    %v597 = vmul.f32 %v579, %v595
    %599 = vrot.lane.b32.xlu0 %v597, 32
    %v600 = vpop.permute.xlu0 %599
    %602 = vst.msk [vmem:[#allocation5 + $0xa] sm:$0x3] %vm251, %v600
    %v603 = vld [vmem:[#allocation4 + $0xc] sm:$0x3]
    %v604 = vld [vmem:[%s4] sm:$0xff]
    %v605 = vld [vmem:[%s4 + $0x8] sm:$0xff]
    %v606 = vld [vmem:[%s4 + $0x10] sm:$0xff]
    %v607 = vld [vmem:[%s4 + $0x18] sm:$0xff]
    %v608 = vsel %vm181, %v600, 0
    %610 = vmatpush.msra.mxu0 0.0
    %611 = vmatpush.msra.mxu0 0.0
    %612 = vmatpush.msra.mxu0 0.0
    %613 = vmatpush.msra.mxu0 0.0
    %614 = vmatpush.msra.mxu0 0.0
    %615 = vmatpush.msra.mxu0 0.0
    %616 = vmatpush.msra.mxu0 0.0
    %617 = vmatpush.msra.mxu0 0.0
    %618 = vmatpush.msra.mxu0 0.0
    %619 = vmatpush.msra.mxu0 0.0
    %620 = vmatpush.msra.mxu0 0.0
    %621 = vmatpush.msra.mxu0 0.0
    %622 = vmatpush.msra.mxu0 %v607
    %623 = vmatpush.msra.mxu0 %v606
    %624 = vmatpush.msra.mxu0 %v605
    %625 = vmatpush.msra.mxu0 %v604
    %626 = vmatmul.f32.gmra.mxu0 %v608
    %v627 = vpop.f32.mrf.mxu0
    %v628 = vadd.f32 0.0, %v627
    %629 = vdwg.mxu0
    %v630 = vadd.f32 %v603, %v628
    %v631 = vxor.u32 %v630, 2147483648
    %v632 = vmul.f32 %v631, 1.442695
    %v633 = vpow.pop %v632
    %v634 = vadd.f32 %v633, 1.0
    %v635 = vrcp.pop %v634
    %v636 = vmul.f32 %v634, %v635
    %v637 = vsub.f32 1.0, %v636
    %v638 = vmul.f32 %v635, %v637
    %v639 = vadd.f32 %v635, %v638
    %vm640 = vweird.f32 %v634
    %vm641 = vweird.f32 %v635
    %vm642 = vmor %vm640, %vm641
    %v643 = vsel %vm642, %v635, %v639
    %v644 = vand.u32 2147483647, %v634
    %vm645 = vcmp.eq.f32.partialorder %v644, 8.507059e+37
    %v646 = vand.u32 %v634, 2147483648
    %v647 = vor.u32 1.1754944e-38, %v646
    %v648 = vsel %vm645, %v647, %v643
    %v649 = vmul.f32 1.0, %v648
    %v650 = vtanh.pop %v630
    %v651 = vmul.f32 %v649, %v591
    %653 = vrot.lane.b32.xlu0 %v650, 64
    %v654 = vpop.permute.xlu0 %653
    %v656 = vmul.f32 %v649, %v654
    %658 = vrot.lane.b32.xlu0 %v656, 32
    %v659 = vpop.permute.xlu0 %658
    %v661 = vadd.f32 %v651, %v659
    %v662 = vtanh.pop %v661
    %664 = vrot.lane.b32.xlu0 %v662, 64
    %v665 = vpop.permute.xlu0 %664
    %v667 = vmul.f32 %v649, %v665
    %669 = vrot.lane.b32.xlu0 %v667, 32
    %v670 = vpop.permute.xlu0 %669
    %672 = vst.msk [vmem:[#allocation5 + $0xc] sm:$0x3] %vm251, %v670
    %v673 = vld [vmem:[#allocation4 + $0xe] sm:$0x3]
    %v674 = vld [vmem:[%s4] sm:$0xff]
    %v675 = vld [vmem:[%s4 + $0x8] sm:$0xff]
    %v676 = vld [vmem:[%s4 + $0x10] sm:$0xff]
    %v677 = vld [vmem:[%s4 + $0x18] sm:$0xff]
    %v678 = vsel %vm181, %v670, 0
    %680 = vmatpush.msra.mxu0 0.0
    %681 = vmatpush.msra.mxu0 0.0
    %682 = vmatpush.msra.mxu0 0.0
    %683 = vmatpush.msra.mxu0 0.0
    %684 = vmatpush.msra.mxu0 0.0
    %685 = vmatpush.msra.mxu0 0.0
    %686 = vmatpush.msra.mxu0 0.0
    %687 = vmatpush.msra.mxu0 0.0
    %688 = vmatpush.msra.mxu0 0.0
    %689 = vmatpush.msra.mxu0 0.0
    %690 = vmatpush.msra.mxu0 0.0
    %691 = vmatpush.msra.mxu0 0.0
    %692 = vmatpush.msra.mxu0 %v677
    %693 = vmatpush.msra.mxu0 %v676
    %694 = vmatpush.msra.mxu0 %v675
    %695 = vmatpush.msra.mxu0 %v674
    %696 = vmatmul.f32.gmra.mxu0 %v678
    %v697 = vpop.f32.mrf.mxu0
    %v698 = vadd.f32 0.0, %v697
    %699 = vdwg.mxu0
    %v700 = vadd.f32 %v673, %v698
    %v701 = vxor.u32 %v700, 2147483648
    %v702 = vmul.f32 %v701, 1.442695
    %v703 = vpow.pop %v702
    %v704 = vadd.f32 %v703, 1.0
    %v705 = vrcp.pop %v704
    %v706 = vmul.f32 %v704, %v705
    %v707 = vsub.f32 1.0, %v706
    %v708 = vmul.f32 %v705, %v707
    %v709 = vadd.f32 %v705, %v708
    %vm710 = vweird.f32 %v704
    %vm711 = vweird.f32 %v705
    %vm712 = vmor %vm710, %vm711
    %v713 = vsel %vm712, %v705, %v709
    %v714 = vand.u32 2147483647, %v704
    %vm715 = vcmp.eq.f32.partialorder %v714, 8.507059e+37
    %v716 = vand.u32 %v704, 2147483648
    %v717 = vor.u32 1.1754944e-38, %v716
    %v718 = vsel %vm715, %v717, %v713
    %v719 = vmul.f32 1.0, %v718
    %v720 = vtanh.pop %v700
    %v721 = vmul.f32 %v719, %v661
    %723 = vrot.lane.b32.xlu0 %v720, 64
    %v724 = vpop.permute.xlu0 %723
    %v726 = vmul.f32 %v719, %v724
    %728 = vrot.lane.b32.xlu0 %v726, 32
    %v729 = vpop.permute.xlu0 %728
    %v731 = vadd.f32 %v721, %v729
    %v732 = vtanh.pop %v731
    %734 = vrot.lane.b32.xlu0 %v732, 64
    %v735 = vpop.permute.xlu0 %734
    %v737 = vmul.f32 %v719, %v735
    %739 = vrot.lane.b32.xlu0 %v737, 32
    %v740 = vpop.permute.xlu0 %739
    %742 = vst.msk [vmem:[#allocation5 + $0xe] sm:$0x3] %vm251, %v740
    %743 = vst.msk [vmem:[#allocation2] sm:$0x3] %vm251, %v740
    %745 = vrot.lane.b32.xlu0 %v731, 96
    %v746 = vpop.permute.xlu0 %745
    %748 = vst.msk [vmem:[#allocation3] sm:$0x3] %vm251, %v746
    %v749 = vld [vmem:[#allocation5] sm:$0xff]
    %v750 = vld [vmem:[#allocation5 + $0x8] sm:$0xff]
    %v751 = vld [vmem:[#allocation12] sm:$0xff]
    %v752 = vld [vmem:[#allocation12 + $0x8] sm:$0xff]
    %v753 = vld [vmem:[#allocation12 + $0x10] sm:$0xff]
    %v754 = vld [vmem:[#allocation12 + $0x18] sm:$0xff]
    %v755 = vld [vmem:[%s8] sm:$0x1]
    %v757 = vperm.slane %v755, 0
    %v760 = vsel %vm181, %v749, 0
    %v763 = vsel %vm181, %v750, 0
    %765 = vmatpush.msra.mxu0 0.0
    %766 = vmatpush.msra.mxu0 0.0
    %767 = vmatpush.msra.mxu0 0.0
    %768 = vmatpush.msra.mxu0 0.0
    %769 = vmatpush.msra.mxu0 0.0
    %770 = vmatpush.msra.mxu0 0.0
    %771 = vmatpush.msra.mxu0 0.0
    %772 = vmatpush.msra.mxu0 0.0
    %773 = vmatpush.msra.mxu0 0.0
    %774 = vmatpush.msra.mxu0 0.0
    %775 = vmatpush.msra.mxu0 0.0
    %776 = vmatpush.msra.mxu0 0.0
    %777 = vmatpush.msra.mxu0 %v754
    %778 = vmatpush.msra.mxu0 %v753
    %779 = vmatpush.msra.mxu0 %v752
    %780 = vmatpush.msra.mxu0 %v751
    %781 = vmatmul.f32.gmra.mxu0 %v760
    %v782 = vpop.f32.mrf.mxu0
    %v783 = vadd.f32 %v757, %v782
    %784 = vmatmul.f32.gmra.mxu0 %v763
    %v785 = vpop.f32.mrf.mxu0
    %v786 = vadd.f32 %v757, %v785
    %787 = vdwg.mxu0
    %788 = vst [vmem:[#allocation4] sm:$0xff] %v783
    %789 = vst [vmem:[#allocation4 + $0x8] sm:$0xff] %v786
    %s790 = scalar_lea.vmem [#allocation2], 2
    %v791 = vld [vmem:[%s790] sm:$0x3]
    %s792 = scalar_lea.vmem [#allocation3], 2
    %v793 = vld [vmem:[%s792] sm:$0x3]
    %v794 = vld [vmem:[#allocation4] sm:$0x3]
    %v795 = vld [vmem:[#allocation14] sm:$0xff]
    %v796 = vld [vmem:[#allocation14 + $0x8] sm:$0xff]
    %v797 = vld [vmem:[#allocation14 + $0x10] sm:$0xff]
    %v798 = vld [vmem:[#allocation14 + $0x18] sm:$0xff]
    %v800 = vsel %vm181, %v791, 0
    %802 = vmatpush.msra.mxu0 0.0
    %803 = vmatpush.msra.mxu0 0.0
    %804 = vmatpush.msra.mxu0 0.0
    %805 = vmatpush.msra.mxu0 0.0
    %806 = vmatpush.msra.mxu0 0.0
    %807 = vmatpush.msra.mxu0 0.0
    %808 = vmatpush.msra.mxu0 0.0
    %809 = vmatpush.msra.mxu0 0.0
    %810 = vmatpush.msra.mxu0 0.0
    %811 = vmatpush.msra.mxu0 0.0
    %812 = vmatpush.msra.mxu0 0.0
    %813 = vmatpush.msra.mxu0 0.0
    %814 = vmatpush.msra.mxu0 %v798
    %815 = vmatpush.msra.mxu0 %v797
    %816 = vmatpush.msra.mxu0 %v796
    %817 = vmatpush.msra.mxu0 %v795
    %818 = vmatmul.f32.gmra.mxu0 %v800
    %v819 = vpop.f32.mrf.mxu0
    %v820 = vadd.f32 0.0, %v819
    %821 = vdwg.mxu0
    %v822 = vadd.f32 %v794, %v820
    %v823 = vxor.u32 %v822, 2147483648
    %v824 = vmul.f32 %v823, 1.442695
    %v825 = vpow.pop %v824
    %v826 = vadd.f32 %v825, 1.0
    %v827 = vrcp.pop %v826
    %v828 = vmul.f32 %v826, %v827
    %v829 = vsub.f32 1.0, %v828
    %v830 = vmul.f32 %v827, %v829
    %v831 = vadd.f32 %v827, %v830
    %vm832 = vweird.f32 %v826
    %vm833 = vweird.f32 %v827
    %vm834 = vmor %vm832, %vm833
    %v835 = vsel %vm834, %v827, %v831
    %v836 = vand.u32 2147483647, %v826
    %vm837 = vcmp.eq.f32.partialorder %v836, 8.507059e+37
    %v838 = vand.u32 %v826, 2147483648
    %v839 = vor.u32 1.1754944e-38, %v838
    %v840 = vsel %vm837, %v839, %v835
    %v841 = vmul.f32 1.0, %v840
    %v842 = vtanh.pop %v822
    %844 = vrot.lane.b32.xlu0 %v793, 32
    %v845 = vpop.permute.xlu0 %844
    %v847 = vmul.f32 %v841, %v845
    %849 = vrot.lane.b32.xlu0 %v842, 64
    %v850 = vpop.permute.xlu0 %849
    %v852 = vmul.f32 %v841, %v850
    %854 = vrot.lane.b32.xlu0 %v852, 32
    %v855 = vpop.permute.xlu0 %854
    %v857 = vadd.f32 %v847, %v855
    %v858 = vtanh.pop %v857
    %860 = vrot.lane.b32.xlu0 %v858, 64
    %v861 = vpop.permute.xlu0 %860
    %v863 = vmul.f32 %v841, %v861
    %v864 = vld [vmem:[#allocation4 + $0x2] sm:$0x3]
    %866 = vrot.lane.b32.xlu0 %v863, 32
    %v867 = vpop.permute.xlu0 %866
    %v868 = vsel %vm181, %v867, 0
    %870 = vmatpush.msra.mxu0 0.0
    %871 = vmatpush.msra.mxu0 0.0
    %872 = vmatpush.msra.mxu0 0.0
    %873 = vmatpush.msra.mxu0 0.0
    %874 = vmatpush.msra.mxu0 0.0
    %875 = vmatpush.msra.mxu0 0.0
    %876 = vmatpush.msra.mxu0 0.0
    %877 = vmatpush.msra.mxu0 0.0
    %878 = vmatpush.msra.mxu0 0.0
    %879 = vmatpush.msra.mxu0 0.0
    %880 = vmatpush.msra.mxu0 0.0
    %881 = vmatpush.msra.mxu0 0.0
    %882 = vmatpush.msra.mxu0 %v798
    %883 = vmatpush.msra.mxu0 %v797
    %884 = vmatpush.msra.mxu0 %v796
    %885 = vmatpush.msra.mxu0 %v795
    %886 = vmatmul.f32.gmra.mxu0 %v868
    %v887 = vpop.f32.mrf.mxu0
    %v888 = vadd.f32 0.0, %v887
    %889 = vdwg.mxu0
    %v890 = vadd.f32 %v864, %v888
    %v891 = vxor.u32 %v890, 2147483648
    %v892 = vmul.f32 %v891, 1.442695
    %v893 = vpow.pop %v892
    %v894 = vadd.f32 %v893, 1.0
    %v895 = vrcp.pop %v894
    %v896 = vmul.f32 %v894, %v895
    %v897 = vsub.f32 1.0, %v896
    %v898 = vmul.f32 %v895, %v897
    %v899 = vadd.f32 %v895, %v898
    %vm900 = vweird.f32 %v894
    %vm901 = vweird.f32 %v895
    %vm902 = vmor %vm900, %vm901
    %v903 = vsel %vm902, %v895, %v899
    %v904 = vand.u32 2147483647, %v894
    %vm905 = vcmp.eq.f32.partialorder %v904, 8.507059e+37
    %v906 = vand.u32 %v894, 2147483648
    %v907 = vor.u32 1.1754944e-38, %v906
    %v908 = vsel %vm905, %v907, %v903
    %v909 = vmul.f32 1.0, %v908
    %v910 = vtanh.pop %v890
    %v911 = vmul.f32 %v909, %v857
    %913 = vrot.lane.b32.xlu0 %v910, 64
    %v914 = vpop.permute.xlu0 %913
    %v916 = vmul.f32 %v909, %v914
    %918 = vrot.lane.b32.xlu0 %v916, 32
    %v919 = vpop.permute.xlu0 %918
    %v921 = vadd.f32 %v911, %v919
    %v922 = vtanh.pop %v921
    %924 = vrot.lane.b32.xlu0 %v922, 64
    %v925 = vpop.permute.xlu0 %924
    %v927 = vmul.f32 %v909, %v925
    %v928 = vld [vmem:[#allocation4 + $0x4] sm:$0x3]
    %930 = vrot.lane.b32.xlu0 %v927, 32
    %v931 = vpop.permute.xlu0 %930
    %v932 = vsel %vm181, %v931, 0
    %934 = vmatpush.msra.mxu0 0.0
    %935 = vmatpush.msra.mxu0 0.0
    %936 = vmatpush.msra.mxu0 0.0
    %937 = vmatpush.msra.mxu0 0.0
    %938 = vmatpush.msra.mxu0 0.0
    %939 = vmatpush.msra.mxu0 0.0
    %940 = vmatpush.msra.mxu0 0.0
    %941 = vmatpush.msra.mxu0 0.0
    %942 = vmatpush.msra.mxu0 0.0
    %943 = vmatpush.msra.mxu0 0.0
    %944 = vmatpush.msra.mxu0 0.0
    %945 = vmatpush.msra.mxu0 0.0
    %946 = vmatpush.msra.mxu0 %v798
    %947 = vmatpush.msra.mxu0 %v797
    %948 = vmatpush.msra.mxu0 %v796
    %949 = vmatpush.msra.mxu0 %v795
    %950 = vmatmul.f32.gmra.mxu0 %v932
    %v951 = vpop.f32.mrf.mxu0
    %v952 = vadd.f32 0.0, %v951
    %953 = vdwg.mxu0
    %v954 = vadd.f32 %v928, %v952
    %v955 = vxor.u32 %v954, 2147483648
    %v956 = vmul.f32 %v955, 1.442695
    %v957 = vpow.pop %v956
    %v958 = vadd.f32 %v957, 1.0
    %v959 = vrcp.pop %v958
    %v960 = vmul.f32 %v958, %v959
    %v961 = vsub.f32 1.0, %v960
    %v962 = vmul.f32 %v959, %v961
    %v963 = vadd.f32 %v959, %v962
    %vm964 = vweird.f32 %v958
    %vm965 = vweird.f32 %v959
    %vm966 = vmor %vm964, %vm965
    %v967 = vsel %vm966, %v959, %v963
    %v968 = vand.u32 2147483647, %v958
    %vm969 = vcmp.eq.f32.partialorder %v968, 8.507059e+37
    %v970 = vand.u32 %v958, 2147483648
    %v971 = vor.u32 1.1754944e-38, %v970
    %v972 = vsel %vm969, %v971, %v967
    %v973 = vmul.f32 1.0, %v972
    %v974 = vtanh.pop %v954
    %v975 = vmul.f32 %v973, %v921
    %977 = vrot.lane.b32.xlu0 %v974, 64
    %v978 = vpop.permute.xlu0 %977
    %v980 = vmul.f32 %v973, %v978
    %982 = vrot.lane.b32.xlu0 %v980, 32
    %v983 = vpop.permute.xlu0 %982
    %v985 = vadd.f32 %v975, %v983
    %v986 = vtanh.pop %v985
    %988 = vrot.lane.b32.xlu0 %v986, 64
    %v989 = vpop.permute.xlu0 %988
    %v991 = vmul.f32 %v973, %v989
    %v992 = vld [vmem:[#allocation4 + $0x6] sm:$0x3]
    %994 = vrot.lane.b32.xlu0 %v991, 32
    %v995 = vpop.permute.xlu0 %994
    %v996 = vsel %vm181, %v995, 0
    %998 = vmatpush.msra.mxu0 0.0
    %999 = vmatpush.msra.mxu0 0.0
    %1000 = vmatpush.msra.mxu0 0.0
    %1001 = vmatpush.msra.mxu0 0.0
    %1002 = vmatpush.msra.mxu0 0.0
    %1003 = vmatpush.msra.mxu0 0.0
    %1004 = vmatpush.msra.mxu0 0.0
    %1005 = vmatpush.msra.mxu0 0.0
    %1006 = vmatpush.msra.mxu0 0.0
    %1007 = vmatpush.msra.mxu0 0.0
    %1008 = vmatpush.msra.mxu0 0.0
    %1009 = vmatpush.msra.mxu0 0.0
    %1010 = vmatpush.msra.mxu0 %v798
    %1011 = vmatpush.msra.mxu0 %v797
    %1012 = vmatpush.msra.mxu0 %v796
    %1013 = vmatpush.msra.mxu0 %v795
    %1014 = vmatmul.f32.gmra.mxu0 %v996
    %v1015 = vpop.f32.mrf.mxu0
    %v1016 = vadd.f32 0.0, %v1015
    %1017 = vdwg.mxu0
    %v1018 = vadd.f32 %v992, %v1016
    %v1019 = vxor.u32 %v1018, 2147483648
    %v1020 = vmul.f32 %v1019, 1.442695
    %v1021 = vpow.pop %v1020
    %v1022 = vadd.f32 %v1021, 1.0
    %v1023 = vrcp.pop %v1022
    %v1024 = vmul.f32 %v1022, %v1023
    %v1025 = vsub.f32 1.0, %v1024
    %v1026 = vmul.f32 %v1023, %v1025
    %v1027 = vadd.f32 %v1023, %v1026
    %vm1028 = vweird.f32 %v1022
    %vm1029 = vweird.f32 %v1023
    %vm1030 = vmor %vm1028, %vm1029
    %v1031 = vsel %vm1030, %v1023, %v1027
    %v1032 = vand.u32 2147483647, %v1022
    %vm1033 = vcmp.eq.f32.partialorder %v1032, 8.507059e+37
    %v1034 = vand.u32 %v1022, 2147483648
    %v1035 = vor.u32 1.1754944e-38, %v1034
    %v1036 = vsel %vm1033, %v1035, %v1031
    %v1037 = vmul.f32 1.0, %v1036
    %v1038 = vtanh.pop %v1018
    %v1039 = vmul.f32 %v1037, %v985
    %1041 = vrot.lane.b32.xlu0 %v1038, 64
    %v1042 = vpop.permute.xlu0 %1041
    %v1044 = vmul.f32 %v1037, %v1042
    %1046 = vrot.lane.b32.xlu0 %v1044, 32
    %v1047 = vpop.permute.xlu0 %1046
    %v1049 = vadd.f32 %v1039, %v1047
    %v1050 = vtanh.pop %v1049
    %1052 = vrot.lane.b32.xlu0 %v1050, 64
    %v1053 = vpop.permute.xlu0 %1052
    %v1055 = vmul.f32 %v1037, %v1053
    %v1056 = vld [vmem:[#allocation4 + $0x8] sm:$0x3]
    %1058 = vrot.lane.b32.xlu0 %v1055, 32
    %v1059 = vpop.permute.xlu0 %1058
    %v1060 = vsel %vm181, %v1059, 0
    %1062 = vmatpush.msra.mxu0 0.0
    %1063 = vmatpush.msra.mxu0 0.0
    %1064 = vmatpush.msra.mxu0 0.0
    %1065 = vmatpush.msra.mxu0 0.0
    %1066 = vmatpush.msra.mxu0 0.0
    %1067 = vmatpush.msra.mxu0 0.0
    %1068 = vmatpush.msra.mxu0 0.0
    %1069 = vmatpush.msra.mxu0 0.0
    %1070 = vmatpush.msra.mxu0 0.0
    %1071 = vmatpush.msra.mxu0 0.0
    %1072 = vmatpush.msra.mxu0 0.0
    %1073 = vmatpush.msra.mxu0 0.0
    %1074 = vmatpush.msra.mxu0 %v798
    %1075 = vmatpush.msra.mxu0 %v797
    %1076 = vmatpush.msra.mxu0 %v796
    %1077 = vmatpush.msra.mxu0 %v795
    %1078 = vmatmul.f32.gmra.mxu0 %v1060
    %v1079 = vpop.f32.mrf.mxu0
    %v1080 = vadd.f32 0.0, %v1079
    %1081 = vdwg.mxu0
    %v1082 = vadd.f32 %v1056, %v1080
    %v1083 = vxor.u32 %v1082, 2147483648
    %v1084 = vmul.f32 %v1083, 1.442695
    %v1085 = vpow.pop %v1084
    %v1086 = vadd.f32 %v1085, 1.0
    %v1087 = vrcp.pop %v1086
    %v1088 = vmul.f32 %v1086, %v1087
    %v1089 = vsub.f32 1.0, %v1088
    %v1090 = vmul.f32 %v1087, %v1089
    %v1091 = vadd.f32 %v1087, %v1090
    %vm1092 = vweird.f32 %v1086
    %vm1093 = vweird.f32 %v1087
    %vm1094 = vmor %vm1092, %vm1093
    %v1095 = vsel %vm1094, %v1087, %v1091
    %v1096 = vand.u32 2147483647, %v1086
    %vm1097 = vcmp.eq.f32.partialorder %v1096, 8.507059e+37
    %v1098 = vand.u32 %v1086, 2147483648
    %v1099 = vor.u32 1.1754944e-38, %v1098
    %v1100 = vsel %vm1097, %v1099, %v1095
    %v1101 = vmul.f32 1.0, %v1100
    %v1102 = vtanh.pop %v1082
    %v1103 = vmul.f32 %v1101, %v1049
    %1105 = vrot.lane.b32.xlu0 %v1102, 64
    %v1106 = vpop.permute.xlu0 %1105
    %v1108 = vmul.f32 %v1101, %v1106
    %1110 = vrot.lane.b32.xlu0 %v1108, 32
    %v1111 = vpop.permute.xlu0 %1110
    %v1113 = vadd.f32 %v1103, %v1111
    %v1114 = vtanh.pop %v1113
    %1116 = vrot.lane.b32.xlu0 %v1114, 64
    %v1117 = vpop.permute.xlu0 %1116
    %v1119 = vmul.f32 %v1101, %v1117
    %v1120 = vld [vmem:[#allocation4 + $0xa] sm:$0x3]
    %1122 = vrot.lane.b32.xlu0 %v1119, 32
    %v1123 = vpop.permute.xlu0 %1122
    %v1124 = vsel %vm181, %v1123, 0
    %1126 = vmatpush.msra.mxu0 0.0
    %1127 = vmatpush.msra.mxu0 0.0
    %1128 = vmatpush.msra.mxu0 0.0
    %1129 = vmatpush.msra.mxu0 0.0
    %1130 = vmatpush.msra.mxu0 0.0
    %1131 = vmatpush.msra.mxu0 0.0
    %1132 = vmatpush.msra.mxu0 0.0
    %1133 = vmatpush.msra.mxu0 0.0
    %1134 = vmatpush.msra.mxu0 0.0
    %1135 = vmatpush.msra.mxu0 0.0
    %1136 = vmatpush.msra.mxu0 0.0
    %1137 = vmatpush.msra.mxu0 0.0
    %1138 = vmatpush.msra.mxu0 %v798
    %1139 = vmatpush.msra.mxu0 %v797
    %1140 = vmatpush.msra.mxu0 %v796
    %1141 = vmatpush.msra.mxu0 %v795
    %1142 = vmatmul.f32.gmra.mxu0 %v1124
    %v1143 = vpop.f32.mrf.mxu0
    %v1144 = vadd.f32 0.0, %v1143
    %1145 = vdwg.mxu0
    %v1146 = vadd.f32 %v1120, %v1144
    %v1147 = vxor.u32 %v1146, 2147483648
    %v1148 = vmul.f32 %v1147, 1.442695
    %v1149 = vpow.pop %v1148
    %v1150 = vadd.f32 %v1149, 1.0
    %v1151 = vrcp.pop %v1150
    %v1152 = vmul.f32 %v1150, %v1151
    %v1153 = vsub.f32 1.0, %v1152
    %v1154 = vmul.f32 %v1151, %v1153
    %v1155 = vadd.f32 %v1151, %v1154
    %vm1156 = vweird.f32 %v1150
    %vm1157 = vweird.f32 %v1151
    %vm1158 = vmor %vm1156, %vm1157
    %v1159 = vsel %vm1158, %v1151, %v1155
    %v1160 = vand.u32 2147483647, %v1150
    %vm1161 = vcmp.eq.f32.partialorder %v1160, 8.507059e+37
    %v1162 = vand.u32 %v1150, 2147483648
    %v1163 = vor.u32 1.1754944e-38, %v1162
    %v1164 = vsel %vm1161, %v1163, %v1159
    %v1165 = vmul.f32 1.0, %v1164
    %v1166 = vtanh.pop %v1146
    %v1167 = vmul.f32 %v1165, %v1113
    %1169 = vrot.lane.b32.xlu0 %v1166, 64
    %v1170 = vpop.permute.xlu0 %1169
    %v1172 = vmul.f32 %v1165, %v1170
    %1174 = vrot.lane.b32.xlu0 %v1172, 32
    %v1175 = vpop.permute.xlu0 %1174
    %v1177 = vadd.f32 %v1167, %v1175
    %v1178 = vtanh.pop %v1177
    %1180 = vrot.lane.b32.xlu0 %v1178, 64
    %v1181 = vpop.permute.xlu0 %1180
    %v1183 = vmul.f32 %v1165, %v1181
    %v1184 = vld [vmem:[#allocation4 + $0xc] sm:$0x3]
    %1186 = vrot.lane.b32.xlu0 %v1183, 32
    %v1187 = vpop.permute.xlu0 %1186
    %v1188 = vsel %vm181, %v1187, 0
    %1190 = vmatpush.msra.mxu0 0.0
    %1191 = vmatpush.msra.mxu0 0.0
    %1192 = vmatpush.msra.mxu0 0.0
    %1193 = vmatpush.msra.mxu0 0.0
    %1194 = vmatpush.msra.mxu0 0.0
    %1195 = vmatpush.msra.mxu0 0.0
    %1196 = vmatpush.msra.mxu0 0.0
    %1197 = vmatpush.msra.mxu0 0.0
    %1198 = vmatpush.msra.mxu0 0.0
    %1199 = vmatpush.msra.mxu0 0.0
    %1200 = vmatpush.msra.mxu0 0.0
    %1201 = vmatpush.msra.mxu0 0.0
    %1202 = vmatpush.msra.mxu0 %v798
    %1203 = vmatpush.msra.mxu0 %v797
    %1204 = vmatpush.msra.mxu0 %v796
    %1205 = vmatpush.msra.mxu0 %v795
    %1206 = vmatmul.f32.gmra.mxu0 %v1188
    %v1207 = vpop.f32.mrf.mxu0
    %v1208 = vadd.f32 0.0, %v1207
    %1209 = vdwg.mxu0
    %v1210 = vadd.f32 %v1184, %v1208
    %v1211 = vxor.u32 %v1210, 2147483648
    %v1212 = vmul.f32 %v1211, 1.442695
    %v1213 = vpow.pop %v1212
    %v1214 = vadd.f32 %v1213, 1.0
    %v1215 = vrcp.pop %v1214
    %v1216 = vmul.f32 %v1214, %v1215
    %v1217 = vsub.f32 1.0, %v1216
    %v1218 = vmul.f32 %v1215, %v1217
    %v1219 = vadd.f32 %v1215, %v1218
    %vm1220 = vweird.f32 %v1214
    %vm1221 = vweird.f32 %v1215
    %vm1222 = vmor %vm1220, %vm1221
    %v1223 = vsel %vm1222, %v1215, %v1219
    %v1224 = vand.u32 2147483647, %v1214
    %vm1225 = vcmp.eq.f32.partialorder %v1224, 8.507059e+37
    %v1226 = vand.u32 %v1214, 2147483648
    %v1227 = vor.u32 1.1754944e-38, %v1226
    %v1228 = vsel %vm1225, %v1227, %v1223
    %v1229 = vmul.f32 1.0, %v1228
    %v1230 = vtanh.pop %v1210
    %v1231 = vmul.f32 %v1229, %v1177
    %1233 = vrot.lane.b32.xlu0 %v1230, 64
    %v1234 = vpop.permute.xlu0 %1233
    %v1236 = vmul.f32 %v1229, %v1234
    %1238 = vrot.lane.b32.xlu0 %v1236, 32
    %v1239 = vpop.permute.xlu0 %1238
    %v1241 = vadd.f32 %v1231, %v1239
    %v1242 = vtanh.pop %v1241
    %1244 = vrot.lane.b32.xlu0 %v1242, 64
    %v1245 = vpop.permute.xlu0 %1244
    %v1247 = vmul.f32 %v1229, %v1245
    %v1248 = vld [vmem:[#allocation4 + $0xe] sm:$0x3]
    %1250 = vrot.lane.b32.xlu0 %v1247, 32
    %v1251 = vpop.permute.xlu0 %1250
    %v1252 = vsel %vm181, %v1251, 0
    %1254 = vmatpush.msra.mxu0 0.0
    %1255 = vmatpush.msra.mxu0 0.0
    %1256 = vmatpush.msra.mxu0 0.0
    %1257 = vmatpush.msra.mxu0 0.0
    %1258 = vmatpush.msra.mxu0 0.0
    %1259 = vmatpush.msra.mxu0 0.0
    %1260 = vmatpush.msra.mxu0 0.0
    %1261 = vmatpush.msra.mxu0 0.0
    %1262 = vmatpush.msra.mxu0 0.0
    %1263 = vmatpush.msra.mxu0 0.0
    %1264 = vmatpush.msra.mxu0 0.0
    %1265 = vmatpush.msra.mxu0 0.0
    %1266 = vmatpush.msra.mxu0 %v798
    %1267 = vmatpush.msra.mxu0 %v797
    %1268 = vmatpush.msra.mxu0 %v796
    %1269 = vmatpush.msra.mxu0 %v795
    %1270 = vmatmul.f32.gmra.mxu0 %v1252
    %v1271 = vpop.f32.mrf.mxu0
    %v1272 = vadd.f32 0.0, %v1271
    %1273 = vdwg.mxu0
    %v1274 = vadd.f32 %v1248, %v1272
    %v1275 = vxor.u32 %v1274, 2147483648
    %v1276 = vmul.f32 %v1275, 1.442695
    %v1277 = vpow.pop %v1276
    %v1278 = vadd.f32 %v1277, 1.0
    %v1279 = vrcp.pop %v1278
    %v1280 = vmul.f32 %v1278, %v1279
    %v1281 = vsub.f32 1.0, %v1280
    %v1282 = vmul.f32 %v1279, %v1281
    %v1283 = vadd.f32 %v1279, %v1282
    %vm1284 = vweird.f32 %v1278
    %vm1285 = vweird.f32 %v1279
    %vm1286 = vmor %vm1284, %vm1285
    %v1287 = vsel %vm1286, %v1279, %v1283
    %v1288 = vand.u32 2147483647, %v1278
    %vm1289 = vcmp.eq.f32.partialorder %v1288, 8.507059e+37
    %v1290 = vand.u32 %v1278, 2147483648
    %v1291 = vor.u32 1.1754944e-38, %v1290
    %v1292 = vsel %vm1289, %v1291, %v1287
    %v1293 = vmul.f32 1.0, %v1292
    %v1294 = vtanh.pop %v1274
    %v1295 = vmul.f32 %v1293, %v1241
    %1297 = vrot.lane.b32.xlu0 %v1294, 64
    %v1298 = vpop.permute.xlu0 %1297
    %v1300 = vmul.f32 %v1293, %v1298
    %1302 = vrot.lane.b32.xlu0 %v1300, 32
    %v1303 = vpop.permute.xlu0 %1302
    %v1305 = vadd.f32 %v1295, %v1303
    %v1306 = vtanh.pop %v1305
    %1308 = vrot.lane.b32.xlu0 %v1306, 64
    %v1309 = vpop.permute.xlu0 %1308
    %v1311 = vmul.f32 %v1293, %v1309
    %1313 = vrot.lane.b32.xlu0 %v1311, 32
    %v1314 = vpop.permute.xlu0 %1313
    %1316 = vst.msk [vmem:[%s790] sm:$0x3] %vm251, %v1314
    %1318 = vrot.lane.b32.xlu0 %v1305, 96
    %v1319 = vpop.permute.xlu0 %1318
    %1321 = vst.msk [vmem:[%s792] sm:$0x3] %vm251, %v1319
    // Predicated region
    $region70: #{tpu_custom_call.1} parent=1 // pred_check
      %p1322 = pneg %p121
    $region71: #{tpu_custom_call.1} parent=1 // pred_check_branch
      %1324 = sbr.rel (%p1322) target = $region73
    $region72: #{tpu_custom_call.1} parent=1 // pred_region
      %1325 = vst.msk [vmem:[#allocation16] sm:$0x3] %vm251, %v740
      %1326 = vst.msk [vmem:[#allocation18] sm:$0x3] %vm251, %v746
      %s1327 = scalar_lea.vmem [#allocation16], 2
      %1328 = vst.msk [vmem:[%s1327] sm:$0x3] %vm251, %v1314
      %s1329 = scalar_lea.vmem [#allocation18], 2
      %1330 = vst.msk [vmem:[%s1329] sm:$0x3] %vm251, %v1319
      %v1331 = vld [vmem:[%s9] sm:$0xff]
      %v1332 = vld [vmem:[%s9 + $0x8] sm:$0xff]
      %v1333 = vld [vmem:[%s9 + $0x10] sm:$0xff]
      %v1334 = vld [vmem:[%s9 + $0x18] sm:$0xff]
      %v1335 = vld [vmem:[%s10] sm:$0x1]
      %v1337 = vperm.slane %v1335, 0
      %v1339 = vsel %vm181, %v1314, 0
      %1341 = vmatpush.msra.mxu0 0.0
      %1342 = vmatpush.msra.mxu0 0.0
      %1343 = vmatpush.msra.mxu0 0.0
      %1344 = vmatpush.msra.mxu0 0.0
      %1345 = vmatpush.msra.mxu0 0.0
      %1346 = vmatpush.msra.mxu0 0.0
      %1347 = vmatpush.msra.mxu0 0.0
      %1348 = vmatpush.msra.mxu0 0.0
      %1349 = vmatpush.msra.mxu0 0.0
      %1350 = vmatpush.msra.mxu0 0.0
      %1351 = vmatpush.msra.mxu0 0.0
      %1352 = vmatpush.msra.mxu0 0.0
      %1353 = vmatpush.msra.mxu0 %v1334
      %1354 = vmatpush.msra.mxu0 %v1333
      %1355 = vmatpush.msra.mxu0 %v1332
      %1356 = vmatpush.msra.mxu0 %v1331
      %1357 = vmatmul.f32.gmra.mxu0 %v1339
      %v1358 = vpop.f32.mrf.mxu0
      %v1359 = vadd.f32 %v1337, %v1358
      %1360 = vdwg.mxu0
      %vm1361 = vcmask 25600
      %1362 = vst.msk [vmem:[#allocation15] sm:$0x3] %vm1361, %v1359
    $region73: #{tpu_custom_call.1} parent=1 // pred_fallthru
      _
    // Predicated region
    $region74: #{tpu_custom_call.1} parent=1 // pred_check
      _
    $region75: #{tpu_custom_call.1} parent=1 // pred_check_branch
      %1364 = sbr.rel (0) target = $region77
    $region76: #{tpu_custom_call.1} parent=1 // pred_region
      %1366 = vsyncadd [#allocation8], 0
      %s1368 = sshll.u32 [#allocation15], 4
      %s1369 = int_to_ptr.vmem [resolvable:$true] %s1368
      %s1370 = sshll.u32 %s11, 4
      %s1371 = int_to_ptr.hbm [resolvable:$true] %s1370
      %1373 = dma.vmem_to_hbm [thread:$0]  %s1369, 32, %s1371, [#allocation8]
    $region77: #{tpu_custom_call.1} parent=1 // pred_fallthru
      _
    // Predicated region
    $region78: #{tpu_custom_call.1} parent=1 // pred_check
      _
    $region79: #{tpu_custom_call.1} parent=1 // pred_check_branch
      %1375 = sbr.rel (0) target = $region81
    $region80: #{tpu_custom_call.1} parent=1 // pred_region
      %1377 = vsyncadd [#allocation17], 0
      %s1378 = sshll.u32 [#allocation16], 4
      %s1379 = int_to_ptr.vmem [resolvable:$true] %s1378
      %s1380 = sshll.u32 %s12, 4
      %s1381 = int_to_ptr.hbm [resolvable:$true] %s1380
      %1386 = dma.vmem_to_hbm [thread:$0]  %s1379, 64, %s1381, [#allocation17], 32, 32, 2
    $region81: #{tpu_custom_call.1} parent=1 // pred_fallthru
      _
    // Predicated region
    $region82: #{tpu_custom_call.1} parent=1 // pred_check
      _
    $region83: #{tpu_custom_call.1} parent=1 // pred_check_branch
      %1388 = sbr.rel (0) target = $region85
    $region84: #{tpu_custom_call.1} parent=1 // pred_region
      %1390 = vsyncadd [#allocation17], 0
      %s1391 = sshll.u32 [#allocation18], 4
      %s1392 = int_to_ptr.vmem [resolvable:$true] %s1391
      %s1393 = sshll.u32 %s13, 4
      %s1394 = int_to_ptr.hbm [resolvable:$true] %s1393
      %1399 = dma.vmem_to_hbm [thread:$0]  %s1392, 64, %s1394, [#allocation17], 32, 32, 2
    $region85: #{tpu_custom_call.1} parent=1 // pred_fallthru
      _
    // Predicated region
    $region86: #{tpu_custom_call.1} parent=1 // pred_check
      _
    $region87: #{tpu_custom_call.1} parent=1 // pred_check_branch
      %1401 = sbr.rel (0) target = $region89
    $region88: #{tpu_custom_call.1} parent=1 // pred_region
      %1403 = dma.done [#allocation8], 32
    $region89: #{tpu_custom_call.1} parent=1 // pred_fallthru
      _
    // Predicated region
    $region90: #{tpu_custom_call.1} parent=1 // pred_check
      _
    $region91: #{tpu_custom_call.1} parent=1 // pred_check_branch
      %1405 = sbr.rel (0) target = $region93
    $region92: #{tpu_custom_call.1} parent=1 // pred_region
      %1407 = dma.done [#allocation17], 64
    $region93: #{tpu_custom_call.1} parent=1 // pred_fallthru
      _
    // Predicated region
    $region94: #{tpu_custom_call.1} parent=1 // pred_check
      _
    $region95: #{tpu_custom_call.1} parent=1 // pred_check_branch
      %1409 = sbr.rel (0) target = $region97
    $region96: #{tpu_custom_call.1} parent=1 // pred_region
      %1411 = dma.done [#allocation17], 64
    $region97: #{tpu_custom_call.1} parent=1 // pred_fallthru
      _
    %1412 = vsyncpa [#allocation7], 1
    %1413 = vsyncpa [#allocation10], 1
    %1414 = vsyncpa [#allocation13], 1
    %1415 = vsyncpa [#allocation8], 1
    %1416 = vsyncpa [#allocation17], 1

</llo_original>
